<compile_context>
chip_gen: v5e
topology: v5e:2x2
jax: 0.10.0
libtpu: 0.0.40
codegen_flags: <defaults>
</compile_context>

<pallas_src>
import jax
import jax.numpy as jnp
import numpy as np
from jax.experimental import pallas as pl
from jax.experimental.pallas import tpu as pltpu

_EPS = 1e-5
_MIB = 1024 * 1024


def _ffn_kernel(x_ref, ln_g_ref, ln_b_ref, w1_ref, b1_ref, w2_ref, b2_ref,
                o_ref):
    # x_ref: (tm, D) tile of flattened rows.
    x = x_ref[...].astype(jnp.float32)

    # ---- LayerNorm over the model dimension (f32, biased variance) ---------
    mu = jnp.mean(x, axis=-1, keepdims=True)
    var = jnp.mean(jnp.square(x - mu), axis=-1, keepdims=True)
    xn = (x - mu) * jax.lax.rsqrt(var + _EPS)
    xn = xn * ln_g_ref[...] + ln_b_ref[...]                         # (tm, D)

    # ---- linear1: (tm, D) x (D, H) on the MXU, bf16 in / f32 accumulate ----
    h = jnp.dot(xn.astype(jnp.bfloat16), w1_ref[...],
                preferred_element_type=jnp.float32) + b1_ref[...]   # (tm, H)

    # ---- SiLU via one tanh push: x*sigmoid(x) == 0.5*x*(1+tanh(x/2)) -------
    h = 0.5 * h * (1.0 + jnp.tanh(0.5 * h))
    # dropout1: identity (inference).

    # ---- linear2: (tm, H) x (H, D) on the MXU -------------------------------
    out = jnp.dot(h.astype(jnp.bfloat16), w2_ref[...],
                  preferred_element_type=jnp.float32) + b2_ref[...]  # (tm, D)
    # dropout2: identity (inference).

    o_ref[...] = out.astype(o_ref.dtype)


def _round_up(n, m):
    return ((n + m - 1) // m) * m


def _vmem_limit_bytes():
    """Generation-aware scoped-VMEM limit (128 MiB chips vs. 64 MiB v7x)."""
    try:
        cap = pltpu.get_tpu_info().vmem_capacity_bytes
    except Exception:
        cap = 64 * _MIB  # conservative: works on every generation
    if cap >= 128 * _MIB:                      # v5e / v6e
        return 100 * _MIB
    return max(32 * _MIB, min(cap - 12 * _MIB, 52 * _MIB))   # v7x-class


def _choose_tm(M, D, H, x_bytes, out_bytes, vmem_limit):
    """Pick the largest MXU-friendly row tile that fits the VMEM budget."""
    # Resident operands; assume worst-case 2 buffers in case Buffered(1)
    # is unavailable on this jax version.
    weight_bytes = 2 * (D * H * 2 + H * D * 2 + (3 * D + H) * 4)
    budget = int((vmem_limit - weight_bytes) * 0.8)
    per_row = (2 * D * x_bytes        # activation input, double-buffered
               + 2 * D * out_bytes    # output, double-buffered
               + D * (4 + 2)          # xn f32 + bf16 copy
               + H * (4 + 2)          # h f32 + bf16 copy
               + D * 4)               # pre-cast f32 output
    # Fill the 256-wide MXU M dimension when there are enough rows.
    gran = 256 if M >= 512 else 8
    tm = max(gran, (max(budget, 0) // per_row) // gran * gran)
    tm = min(tm, 2048)
    # Keep >= 2 grid steps so v7x's two TensorCores both get work.
    if M > gran:
        tm = min(tm, _round_up((M + 1) // 2, gran))
    tm = min(tm, _round_up(M, gran))
    return max(8, _round_up(min(tm, max(M, 8)), 8))


def _build_call(M, D, H, tm, out_dtype, vmem_limit, resident_single_buffer):
    pm = dict(pipeline_mode=pl.Buffered(1)) if resident_single_buffer else {}

    def resident(shape):
        # Constant index_map -> operand stays VMEM-resident across grid steps.
        return pl.BlockSpec(shape, lambda i: (0, 0), **pm)

    in_specs = [
        pl.BlockSpec((tm, D), lambda i: (i, 0)),   # activation rows (tiled)
        resident((1, D)),                          # LN gamma
        resident((1, D)),                          # LN beta
        resident((D, H)),                          # w1
        resident((1, H)),                          # b1
        resident((H, D)),                          # w2
        resident((1, D)),                          # b2
    ]
    return pl.pallas_call(
        _ffn_kernel,
        out_shape=jax.ShapeDtypeStruct((M, D), out_dtype),
        grid=(pl.cdiv(M, tm),),
        in_specs=in_specs,
        out_specs=pl.BlockSpec((tm, D), lambda i: (i, 0)),
        compiler_params=pltpu.CompilerParams(
            dimension_semantics=("parallel",),
            vmem_limit_bytes=vmem_limit),
    )


def feed_forward(x, params, *, block_rows=None):
    """x: (B, T, D); params = (ln_g, ln_b, w1, b1, w2, b2).

    ln_g, ln_b, b1, b2 are (1, dim) float32; w1 is (D, H) bf16, w2 is (H, D)
    bf16 (pre-transposed from PyTorch's (out, in) Linear layout).
    Pass bf16 `x` to halve activation HBM traffic on v6e/v7x; LN and the
    matmul accumulation stay f32 inside the kernel either way.
    """
    ln_g, ln_b, w1, b1, w2, b2 = params
    B, T, D = x.shape
    H = w1.shape[1]
    M = B * T
    xf = x.reshape(M, D)

    vmem_limit = _vmem_limit_bytes()
    if block_rows is None:
        tm = _choose_tm(M, D, H, xf.dtype.itemsize, xf.dtype.itemsize,
                        vmem_limit)
    else:
        tm = max(8, _round_up(min(block_rows, _round_up(M, 8)), 8))

    args = (xf, ln_g, ln_b, w1, b1, w2, b2)
    try:
        out = _build_call(M, D, H, tm, x.dtype, vmem_limit, True)(*args)
    except Exception:
        # pl.Buffered(1) on resident operands not supported on this jax
        # version -> fall back to default (double-buffered) specs.
        out = _build_call(M, D, H, tm, x.dtype, vmem_limit, False)(*args)

    return out.reshape(B, T, D)


def reference_forward(x, params):
    """Pure-JAX f32 reference matching the PyTorch module's math."""
    ln_g, ln_b, w1, b1, w2, b2 = params
    B, T, D = x.shape
    xf = x.astype(jnp.float32)
    mu = jnp.mean(xf, -1, keepdims=True)
    var = jnp.mean(jnp.square(xf - mu), -1, keepdims=True)
    xn = (xf - mu) / jnp.sqrt(var + _EPS) * ln_g + ln_b
    h = jnp.dot(xn.reshape(B * T, D), w1.astype(jnp.float32)) + b1
    h = h * jax.nn.sigmoid(h)                       # SiLU; dropout1 = identity
    out = jnp.dot(h, w2.astype(jnp.float32)) + b2   # dropout2 = identity
    return out.reshape(B, T, D)


if __name__ == "__main__":
    # modeldim=128 (lane-dense), feedforwardexpansion=4, dropout=identity.
    # batch=2, seq=44 -> 88 rows: exercises the no-pad partial-final-block path
    # (auto tile = 48 rows -> grid of 2, last block masked).
    B, T, D, EXP = 2, 44, 128, 4
    H = D * EXP

    key = jax.random.PRNGKey(0)
    ks = jax.random.split(key, 7)

    def vec(k, n, scale=0.1, base=0.0):
        return (base + scale * jax.random.normal(k, (n,), jnp.float32)
                ).reshape(1, n)

    x = jax.random.normal(ks[0], (B, T, D), jnp.float32)

    ln_g = vec(ks[1], D, base=1.0)                                   # LN gamma
    ln_b = vec(ks[2], D)                                             # LN beta
    w1 = (jax.random.normal(ks[3], (D, H), jnp.float32) /
          jnp.sqrt(D)).astype(jnp.bfloat16)                          # (D, H)
    b1 = vec(ks[4], H)
    w2 = (jax.random.normal(ks[5], (H, D), jnp.float32) /
          jnp.sqrt(H)).astype(jnp.bfloat16)                          # (H, D)
    b2 = vec(ks[6], D)

    params = (ln_g, ln_b, w1, b1, w2, b2)

    out = feed_forward(x, params)
    jax.block_until_ready(out)
    assert out.shape == (B, T, D)

    ref = reference_forward(x, params)
    # bf16 matmul inputs (f32 accumulation) vs. an f32 reference -> relaxed tol.
    np.testing.assert_allclose(np.asarray(out), np.asarray(ref),
                               rtol=2e-2, atol=2e-2)
    print("KERNEL_OK")
</pallas_src>

<mosaic_0001>
module attributes {stable_mosaic.version = 11 : i64} {
  func.func @_ffn_kernel(%arg0: i32, %arg1: memref<48x128xf32, #tpu.memory_space<vmem>>, %arg2: memref<1x128xf32, #tpu.memory_space<vmem>>, %arg3: memref<1x128xf32, #tpu.memory_space<vmem>>, %arg4: memref<128x512xbf16, #tpu.memory_space<vmem>>, %arg5: memref<1x512xf32, #tpu.memory_space<vmem>>, %arg6: memref<512x128xbf16, #tpu.memory_space<vmem>>, %arg7: memref<1x128xf32, #tpu.memory_space<vmem>>, %arg8: memref<48x128xf32, #tpu.memory_space<vmem>>) attributes {dimension_semantics = [#tpu.dimension_semantics<parallel>], iteration_bounds = array<i64: 2>, scalar_prefetch = 0 : i64, scratch_operands = 0 : i64, tpu.core_type = #tpu.core_type<tc>, window_params = [{transform_indices = @transform_0, window_bounds = array<i64: 48, 128>}, {pipeline_mode = #tpu.pipeline_mode<synchronous>, transform_indices = @transform_1, window_bounds = array<i64: 1, 128>}, {pipeline_mode = #tpu.pipeline_mode<synchronous>, transform_indices = @transform_2, window_bounds = array<i64: 1, 128>}, {pipeline_mode = #tpu.pipeline_mode<synchronous>, transform_indices = @transform_3, window_bounds = array<i64: 128, 512>}, {pipeline_mode = #tpu.pipeline_mode<synchronous>, transform_indices = @transform_4, window_bounds = array<i64: 1, 512>}, {pipeline_mode = #tpu.pipeline_mode<synchronous>, transform_indices = @transform_5, window_bounds = array<i64: 512, 128>}, {pipeline_mode = #tpu.pipeline_mode<synchronous>, transform_indices = @transform_6, window_bounds = array<i64: 1, 128>}, {transform_indices = @transform_7, window_bounds = array<i64: 48, 128>}]} {
    %c0 = arith.constant 0 : index
    %c0_0 = arith.constant 0 : index
    %0 = vector.load %arg1[%c0, %c0_0] : memref<48x128xf32, #tpu.memory_space<vmem>>, vector<48x128xf32>
    %cst = arith.constant dense<0.000000e+00> : vector<48xf32>
    %1 = vector.multi_reduction <add>, %0, %cst [1] : vector<48x128xf32> to vector<48xf32>
    %2 = vector.shape_cast %1 : vector<48xf32> to vector<48x1xf32>
    %cst_1 = arith.constant 1.280000e+02 : f32
    %3 = vector.broadcast %cst_1 : f32 to vector<48x1xf32>
    %4 = arith.divf %2, %3 : vector<48x1xf32>
    %5 = vector.broadcast %4 : vector<48x1xf32> to vector<48x128xf32>
    %6 = arith.subf %0, %5 : vector<48x128xf32>
    %7 = arith.mulf %6, %6 : vector<48x128xf32>
    %cst_2 = arith.constant dense<0.000000e+00> : vector<48xf32>
    %8 = vector.multi_reduction <add>, %7, %cst_2 [1] : vector<48x128xf32> to vector<48xf32>
    %9 = vector.shape_cast %8 : vector<48xf32> to vector<48x1xf32>
    %cst_3 = arith.constant 1.280000e+02 : f32
    %10 = vector.broadcast %cst_3 : f32 to vector<48x1xf32>
    %11 = arith.divf %9, %10 : vector<48x1xf32>
    %12 = vector.broadcast %4 : vector<48x1xf32> to vector<48x128xf32>
    %13 = arith.subf %0, %12 : vector<48x128xf32>
    %cst_4 = arith.constant 9.99999974E-6 : f32
    %14 = vector.broadcast %cst_4 : f32 to vector<48x1xf32>
    %15 = arith.addf %11, %14 : vector<48x1xf32>
    %16 = math.rsqrt %15 : vector<48x1xf32>
    %17 = vector.broadcast %16 : vector<48x1xf32> to vector<48x128xf32>
    %18 = arith.mulf %13, %17 : vector<48x128xf32>
    %c0_5 = arith.constant 0 : index
    %c0_6 = arith.constant 0 : index
    %19 = vector.load %arg2[%c0_5, %c0_6] : memref<1x128xf32, #tpu.memory_space<vmem>>, vector<1x128xf32>
    %20 = vector.broadcast %19 : vector<1x128xf32> to vector<48x128xf32>
    %21 = arith.mulf %18, %20 : vector<48x128xf32>
    %c0_7 = arith.constant 0 : index
    %c0_8 = arith.constant 0 : index
    %22 = vector.load %arg3[%c0_7, %c0_8] : memref<1x128xf32, #tpu.memory_space<vmem>>, vector<1x128xf32>
    %23 = vector.broadcast %22 : vector<1x128xf32> to vector<48x128xf32>
    %24 = arith.addf %21, %23 : vector<48x128xf32>
    %25 = arith.truncf %24 : vector<48x128xf32> to vector<48x128xbf16>
    %c0_9 = arith.constant 0 : index
    %c0_10 = arith.constant 0 : index
    %26 = vector.load %arg4[%c0_9, %c0_10] : memref<128x512xbf16, #tpu.memory_space<vmem>>, vector<128x512xbf16>
    %cst_11 = arith.constant dense<0.000000e+00> : vector<48x512xf32>
    %27 = tpu.matmul %25, %26, %cst_11 {dimension_numbers = #tpu.dot_dimension_numbers<[1], [0], [0], [1], [0, 0, 1, 1], [], []>} : vector<48x128xbf16>, vector<128x512xbf16>, vector<48x512xf32> -> vector<48x512xf32>
    %c0_12 = arith.constant 0 : index
    %c0_13 = arith.constant 0 : index
    %28 = vector.load %arg5[%c0_12, %c0_13] : memref<1x512xf32, #tpu.memory_space<vmem>>, vector<1x512xf32>
    %29 = vector.broadcast %28 : vector<1x512xf32> to vector<48x512xf32>
    %30 = arith.addf %27, %29 : vector<48x512xf32>
    %cst_14 = arith.constant 5.000000e-01 : f32
    %31 = vector.broadcast %cst_14 : f32 to vector<48x512xf32>
    %32 = arith.mulf %31, %30 : vector<48x512xf32>
    %cst_15 = arith.constant 5.000000e-01 : f32
    %33 = vector.broadcast %cst_15 : f32 to vector<48x512xf32>
    %34 = arith.mulf %33, %30 : vector<48x512xf32>
    %35 = math.tanh %34 : vector<48x512xf32>
    %cst_16 = arith.constant 1.000000e+00 : f32
    %36 = vector.broadcast %cst_16 : f32 to vector<48x512xf32>
    %37 = arith.addf %36, %35 : vector<48x512xf32>
    %38 = arith.mulf %32, %37 : vector<48x512xf32>
    %39 = arith.truncf %38 : vector<48x512xf32> to vector<48x512xbf16>
    %c0_17 = arith.constant 0 : index
    %c0_18 = arith.constant 0 : index
    %40 = vector.load %arg6[%c0_17, %c0_18] : memref<512x128xbf16, #tpu.memory_space<vmem>>, vector<512x128xbf16>
    %cst_19 = arith.constant dense<0.000000e+00> : vector<48x128xf32>
    %41 = tpu.matmul %39, %40, %cst_19 {dimension_numbers = #tpu.dot_dimension_numbers<[1], [0], [0], [1], [0, 0, 1, 1], [], []>} : vector<48x512xbf16>, vector<512x128xbf16>, vector<48x128xf32> -> vector<48x128xf32>
    %c0_20 = arith.constant 0 : index
    %c0_21 = arith.constant 0 : index
    %42 = vector.load %arg7[%c0_20, %c0_21] : memref<1x128xf32, #tpu.memory_space<vmem>>, vector<1x128xf32>
    %43 = vector.broadcast %42 : vector<1x128xf32> to vector<48x128xf32>
    %44 = arith.addf %41, %43 : vector<48x128xf32>
    %c0_22 = arith.constant 0 : index
    %c0_23 = arith.constant 0 : index
    %45 = vector.load %arg8[%c0_22, %c0_23] : memref<48x128xf32, #tpu.memory_space<vmem>>, vector<48x128xf32>
    tpu.vector_store %arg8[%c0_22, %c0_23], %44 {strides = array<i32>} : memref<48x128xf32, #tpu.memory_space<vmem>>, vector<48x128xf32>,
    return
  }
  func.func @transform_0(%arg0: i32) -> (i32, i32) {
    %c0_i32 = arith.constant 0 : i32
    %c0_i32_0 = arith.constant 0 : i32
    return %arg0, %c0_i32 : i32, i32
  }
  func.func @transform_1(%arg0: i32) -> (i32, i32) {
    %c0_i32 = arith.constant 0 : i32
    %c0_i32_0 = arith.constant 0 : i32
    %c0_i32_1 = arith.constant 0 : i32
    return %c0_i32, %c0_i32_0 : i32, i32
  }
  func.func @transform_2(%arg0: i32) -> (i32, i32) {
    %c0_i32 = arith.constant 0 : i32
    %c0_i32_0 = arith.constant 0 : i32
    %c0_i32_1 = arith.constant 0 : i32
    return %c0_i32, %c0_i32_0 : i32, i32
  }
  func.func @transform_3(%arg0: i32) -> (i32, i32) {
    %c0_i32 = arith.constant 0 : i32
    %c0_i32_0 = arith.constant 0 : i32
    %c0_i32_1 = arith.constant 0 : i32
    return %c0_i32, %c0_i32_0 : i32, i32
  }
  func.func @transform_4(%arg0: i32) -> (i32, i32) {
    %c0_i32 = arith.constant 0 : i32
    %c0_i32_0 = arith.constant 0 : i32
    %c0_i32_1 = arith.constant 0 : i32
    return %c0_i32, %c0_i32_0 : i32, i32
  }
  func.func @transform_5(%arg0: i32) -> (i32, i32) {
    %c0_i32 = arith.constant 0 : i32
    %c0_i32_0 = arith.constant 0 : i32
    %c0_i32_1 = arith.constant 0 : i32
    return %c0_i32, %c0_i32_0 : i32, i32
  }
  func.func @transform_6(%arg0: i32) -> (i32, i32) {
    %c0_i32 = arith.constant 0 : i32
    %c0_i32_0 = arith.constant 0 : i32
    %c0_i32_1 = arith.constant 0 : i32
    return %c0_i32, %c0_i32_0 : i32, i32
  }
  func.func @transform_7(%arg0: i32) -> (i32, i32) {
    %c0_i32 = arith.constant 0 : i32
    %c0_i32_0 = arith.constant 0 : i32
    return %arg0, %c0_i32 : i32, i32
  }
}

module attributes {stable_mosaic.version = 11 : i64} {
  func.func @_ffn_kernel(%arg0: i32, %arg1: memref<48x128xf32, #tpu.memory_space<vmem>>, %arg2: memref<1x128xf32, #tpu.memory_space<vmem>>, %arg3: memref<1x128xf32, #tpu.memory_space<vmem>>, %arg4: memref<128x512xbf16, #tpu.memory_space<vmem>>, %arg5: memref<1x512xf32, #tpu.memory_space<vmem>>, %arg6: memref<512x128xbf16, #tpu.memory_space<vmem>>, %arg7: memref<1x128xf32, #tpu.memory_space<vmem>>, %arg8: memref<48x128xf32, #tpu.memory_space<vmem>>) attributes {dimension_semantics = [#tpu.dimension_semantics<parallel>], iteration_bounds = array<i64: 2>, scalar_prefetch = 0 : i64, scratch_operands = 0 : i64, tpu.core_type = #tpu.core_type<tc>, window_params = [{transform_indices = @transform_0, window_bounds = array<i64: 48, 128>}, {pipeline_mode = #tpu.pipeline_mode<synchronous>, transform_indices = @transform_1, window_bounds = array<i64: 1, 128>}, {pipeline_mode = #tpu.pipeline_mode<synchronous>, transform_indices = @transform_2, window_bounds = array<i64: 1, 128>}, {pipeline_mode = #tpu.pipeline_mode<synchronous>, transform_indices = @transform_3, window_bounds = array<i64: 128, 512>}, {pipeline_mode = #tpu.pipeline_mode<synchronous>, transform_indices = @transform_4, window_bounds = array<i64: 1, 512>}, {pipeline_mode = #tpu.pipeline_mode<synchronous>, transform_indices = @transform_5, window_bounds = array<i64: 512, 128>}, {pipeline_mode = #tpu.pipeline_mode<synchronous>, transform_indices = @transform_6, window_bounds = array<i64: 1, 128>}, {transform_indices = @transform_7, window_bounds = array<i64: 48, 128>}]} {
    %c0 = arith.constant 0 : index
    %c0_0 = arith.constant 0 : index
    %0 = vector.load %arg1[%c0, %c0_0] : memref<48x128xf32, #tpu.memory_space<vmem>>, vector<48x128xf32>
    %cst = arith.constant dense<0.000000e+00> : vector<48xf32>
    %1 = vector.multi_reduction <add>, %0, %cst [1] : vector<48x128xf32> to vector<48xf32>
    %2 = vector.shape_cast %1 : vector<48xf32> to vector<48x1xf32>
    %cst_1 = arith.constant 1.280000e+02 : f32
    %3 = vector.broadcast %cst_1 : f32 to vector<48x1xf32>
    %4 = arith.divf %2, %3 : vector<48x1xf32>
    %5 = vector.broadcast %4 : vector<48x1xf32> to vector<48x128xf32>
    %6 = arith.subf %0, %5 : vector<48x128xf32>
    %7 = arith.mulf %6, %6 : vector<48x128xf32>
    %cst_2 = arith.constant dense<0.000000e+00> : vector<48xf32>
    %8 = vector.multi_reduction <add>, %7, %cst_2 [1] : vector<48x128xf32> to vector<48xf32>
    %9 = vector.shape_cast %8 : vector<48xf32> to vector<48x1xf32>
    %cst_3 = arith.constant 1.280000e+02 : f32
    %10 = vector.broadcast %cst_3 : f32 to vector<48x1xf32>
    %11 = arith.divf %9, %10 : vector<48x1xf32>
    %12 = vector.broadcast %4 : vector<48x1xf32> to vector<48x128xf32>
    %13 = arith.subf %0, %12 : vector<48x128xf32>
    %cst_4 = arith.constant 9.99999974E-6 : f32
    %14 = vector.broadcast %cst_4 : f32 to vector<48x1xf32>
    %15 = arith.addf %11, %14 : vector<48x1xf32>
    %16 = math.rsqrt %15 : vector<48x1xf32>
    %17 = vector.broadcast %16 : vector<48x1xf32> to vector<48x128xf32>
    %18 = arith.mulf %13, %17 : vector<48x128xf32>
    %c0_5 = arith.constant 0 : index
    %c0_6 = arith.constant 0 : index
    %19 = vector.load %arg2[%c0_5, %c0_6] : memref<1x128xf32, #tpu.memory_space<vmem>>, vector<1x128xf32>
    %20 = vector.broadcast %19 : vector<1x128xf32> to vector<48x128xf32>
    %21 = arith.mulf %18, %20 : vector<48x128xf32>
    %c0_7 = arith.constant 0 : index
    %c0_8 = arith.constant 0 : index
    %22 = vector.load %arg3[%c0_7, %c0_8] : memref<1x128xf32, #tpu.memory_space<vmem>>, vector<1x128xf32>
    %23 = vector.broadcast %22 : vector<1x128xf32> to vector<48x128xf32>
    %24 = arith.addf %21, %23 : vector<48x128xf32>
    %25 = arith.truncf %24 : vector<48x128xf32> to vector<48x128xbf16>
    %c0_9 = arith.constant 0 : index
    %c0_10 = arith.constant 0 : index
    %26 = vector.load %arg4[%c0_9, %c0_10] : memref<128x512xbf16, #tpu.memory_space<vmem>>, vector<128x512xbf16>
    %cst_11 = arith.constant dense<0.000000e+00> : vector<48x512xf32>
    %27 = tpu.matmul %25, %26, %cst_11 {dimension_numbers = #tpu.dot_dimension_numbers<[1], [0], [0], [1], [0, 0, 1, 1], [], []>} : vector<48x128xbf16>, vector<128x512xbf16>, vector<48x512xf32> -> vector<48x512xf32>
    %c0_12 = arith.constant 0 : index
    %c0_13 = arith.constant 0 : index
    %28 = vector.load %arg5[%c0_12, %c0_13] : memref<1x512xf32, #tpu.memory_space<vmem>>, vector<1x512xf32>
    %29 = vector.broadcast %28 : vector<1x512xf32> to vector<48x512xf32>
    %30 = arith.addf %27, %29 : vector<48x512xf32>
    %cst_14 = arith.constant 5.000000e-01 : f32
    %31 = vector.broadcast %cst_14 : f32 to vector<48x512xf32>
    %32 = arith.mulf %31, %30 : vector<48x512xf32>
    %cst_15 = arith.constant 5.000000e-01 : f32
    %33 = vector.broadcast %cst_15 : f32 to vector<48x512xf32>
    %34 = arith.mulf %33, %30 : vector<48x512xf32>
    %35 = math.tanh %34 : vector<48x512xf32>
    %cst_16 = arith.constant 1.000000e+00 : f32
    %36 = vector.broadcast %cst_16 : f32 to vector<48x512xf32>
    %37 = arith.addf %36, %35 : vector<48x512xf32>
    %38 = arith.mulf %32, %37 : vector<48x512xf32>
    %39 = arith.truncf %38 : vector<48x512xf32> to vector<48x512xbf16>
    %c0_17 = arith.constant 0 : index
    %c0_18 = arith.constant 0 : index
    %40 = vector.load %arg6[%c0_17, %c0_18] : memref<512x128xbf16, #tpu.memory_space<vmem>>, vector<512x128xbf16>
    %cst_19 = arith.constant dense<0.000000e+00> : vector<48x128xf32>
    %41 = tpu.matmul %39, %40, %cst_19 {dimension_numbers = #tpu.dot_dimension_numbers<[1], [0], [0], [1], [0, 0, 1, 1], [], []>} : vector<48x512xbf16>, vector<512x128xbf16>, vector<48x128xf32> -> vector<48x128xf32>
    %c0_20 = arith.constant 0 : index
    %c0_21 = arith.constant 0 : index
    %42 = vector.load %arg7[%c0_20, %c0_21] : memref<1x128xf32, #tpu.memory_space<vmem>>, vector<1x128xf32>
    %43 = vector.broadcast %42 : vector<1x128xf32> to vector<48x128xf32>
    %44 = arith.addf %41, %43 : vector<48x128xf32>
    %c0_22 = arith.constant 0 : index
    %c0_23 = arith.constant 0 : index
    %45 = vector.load %arg8[%c0_22, %c0_23] : memref<48x128xf32, #tpu.memory_space<vmem>>, vector<48x128xf32>
    tpu.vector_store %arg8[%c0_22, %c0_23], %44 {strides = array<i32>} : memref<48x128xf32, #tpu.memory_space<vmem>>, vector<48x128xf32>,
    return
  }
  func.func @transform_0(%arg0: i32) -> (i32, i32) {
    %c0_i32 = arith.constant 0 : i32
    %c0_i32_0 = arith.constant 0 : i32
    return %arg0, %c0_i32 : i32, i32
  }
  func.func @transform_1(%arg0: i32) -> (i32, i32) {
    %c0_i32 = arith.constant 0 : i32
    %c0_i32_0 = arith.constant 0 : i32
    %c0_i32_1 = arith.constant 0 : i32
    return %c0_i32, %c0_i32_0 : i32, i32
  }
  func.func @transform_2(%arg0: i32) -> (i32, i32) {
    %c0_i32 = arith.constant 0 : i32
    %c0_i32_0 = arith.constant 0 : i32
    %c0_i32_1 = arith.constant 0 : i32
    return %c0_i32, %c0_i32_0 : i32, i32
  }
  func.func @transform_3(%arg0: i32) -> (i32, i32) {
    %c0_i32 = arith.constant 0 : i32
    %c0_i32_0 = arith.constant 0 : i32
    %c0_i32_1 = arith.constant 0 : i32
    return %c0_i32, %c0_i32_0 : i32, i32
  }
  func.func @transform_4(%arg0: i32) -> (i32, i32) {
    %c0_i32 = arith.constant 0 : i32
    %c0_i32_0 = arith.constant 0 : i32
    %c0_i32_1 = arith.constant 0 : i32
    return %c0_i32, %c0_i32_0 : i32, i32
  }
  func.func @transform_5(%arg0: i32) -> (i32, i32) {
    %c0_i32 = arith.constant 0 : i32
    %c0_i32_0 = arith.constant 0 : i32
    %c0_i32_1 = arith.constant 0 : i32
    return %c0_i32, %c0_i32_0 : i32, i32
  }
  func.func @transform_6(%arg0: i32) -> (i32, i32) {
    %c0_i32 = arith.constant 0 : i32
    %c0_i32_0 = arith.constant 0 : i32
    %c0_i32_1 = arith.constant 0 : i32
    return %c0_i32, %c0_i32_0 : i32, i32
  }
  func.func @transform_7(%arg0: i32) -> (i32, i32) {
    %c0_i32 = arith.constant 0 : i32
    %c0_i32_0 = arith.constant 0 : i32
    return %arg0, %c0_i32 : i32, i32
  }
}

</mosaic_0001>

<llo_original>
// kernel: tpu_custom_call.1
$region0: #{tpu_custom_call.1}
  #allocation0 [shape = 'u32[]', space=smem, size = 0x4, offset = 0x4, fixed_abs, tag = 'smem constant byte address 0x4 - core index']
  #allocation1 [shape = 'u32[72,128]{1,0:T(1,128)}', space=vmem, size = 0x9000, scoped, tag = 'internal scratch']
  %s0 = inlined_call_operand.hbm [shape: f32[88,128], index: 0, kind: input, shape index: {}]
  %s1 = inlined_call_operand.hbm [shape: f32[1,128], index: 1, kind: input, shape index: {}]
  %s2 = inlined_call_operand.vmem [shape: f32[1,128], index: 2, kind: input, shape index: {}]
  %s3 = inlined_call_operand.hbm [shape: bf16[128,512], index: 3, kind: input, shape index: {}]
  %s4 = inlined_call_operand.hbm [shape: f32[1,512], index: 4, kind: input, shape index: {}]
  %s5 = inlined_call_operand.hbm [shape: bf16[512,128], index: 5, kind: input, shape index: {}]
  %s6 = inlined_call_operand.vmem [shape: f32[1,128], index: 6, kind: input, shape index: {}]
  %s7 = inlined_call_operand.hbm [shape: f32[88,128], index: 7, kind: output, shape index: {}]
  %s8 = sld [smem:[#allocation0]]
  $region81: #{tpu_custom_call.1} parent=0
    _
  %s10 = ssub.s32 1, %s8
  %s11 = scalar_select 0, %s10, %s8
  $region1: #{tpu_custom_call.1} parent=0
    #allocation2 [shape = 'u8[49152]{0}', space=vmem, size = 0xc000, scoped, tag = 'input window, operand 0']
    #allocation3 [shape = 's32[2]{0}', space=sflag, size = 0x8, scoped, tag = 'scoped memory for tpu_custom_call.1']
    #allocation4 [shape = 's32[2]{0}', space=sflag, size = 0x8, scoped, tag = 'scoped memory for tpu_custom_call.1']
    #allocation5 [shape = 'u8[512]{0}', space=vmem, size = 0x400, scoped, tag = 'input window, operand 1, single buffered']
    #allocation6 [shape = 's32[1]{0}', space=sflag, size = 0x4, scoped, tag = 'scoped memory for tpu_custom_call.1']
    #allocation7 [shape = 'u8[131072]{0}', space=vmem, size = 0x20000, scoped, tag = 'input window, operand 3, single buffered']
    #allocation8 [shape = 'u8[2048]{0}', space=vmem, size = 0x800, scoped, tag = 'input window, operand 4, single buffered']
    #allocation9 [shape = 's32[1]{0}', space=sflag, size = 0x4, scoped, tag = 'scoped memory for tpu_custom_call.1']
    #allocation10 [shape = 'u8[131072]{0}', space=vmem, size = 0x20000, scoped, tag = 'input window, operand 5, single buffered']
    #allocation11 [shape = 'u8[49152]{0}', space=vmem, size = 0xc000, scoped, tag = 'output window, operand 0']
    %12 = vsyncpa [#allocation3], 0
    %s13 = scalar_lea.sflag [#allocation3], 1
    %14 = vsyncpa %s13, 0
    %15 = vsyncpa [#allocation6], 0
    %16 = vsyncpa [#allocation9], 0
    %17 = vsyncpa [#allocation4], 0
    %s18 = scalar_lea.sflag [#allocation4], 1
    %19 = vsyncpa %s18, 0
    loop: start=0, step=1, limit=4
    $region2: #{tpu_custom_call.1} parent=1 // loop_pre_header
      _
    $region3: #{tpu_custom_call.1} parent=1 // loop_header
      %s21 = sphi 0, %s25
      %p22 = scmp.ge.s32.totalorder %s21, 4
      %s31 = sphi 0, %s33
      %s34 = sphi 0, %s31
      %s35 = sphi 0, %s34
      %s51 = sphi 0, %s35
      %s55 = sphi 0, %s55
      %s57 = sphi 0, %s55
      %s58 = sphi 0, %s57
      %s72 = sphi 0, %s58
      %s76 = sphi 0, %s76
      %s78 = sphi 0, %s76
      %s79 = sphi 0, %s78
      %s93 = sphi 0, %s79
      %s97 = sphi 0, %s97
      %s99 = sphi 0, %s97
      %s100 = sphi 0, %s99
      %s114 = sphi 0, %s100
      %s118 = sphi 0, %s118
      %s120 = sphi 0, %s118
      %s121 = sphi 0, %s120
      %s135 = sphi 0, %s121
      %s139 = sphi 0, %s139
      %s141 = sphi 0, %s139
      %s142 = sphi 0, %s141
      %s156 = sphi 0, %s142
      %s160 = sphi 0, %s160
      %s162 = sphi 0, %s160
      %s163 = sphi 0, %s162
      %s177 = sphi 0, %s163
      %s183 = sphi 0, %s185
      %s186 = sphi 0, %s183
      %s187 = sphi 0, %s186
      %s203 = sphi 0, %s187
    $region4: #{tpu_custom_call.1} parent=1 // loop_header_branch
      %24 = sbr.rel (%p22) target = $region8
    $region5: #{tpu_custom_call.1} parent=1 // loop_body
      %s26 = ssub.s32 %s21, 1
      %s27 = ssub.s32 %s21, 2
      %s28 = sadd.s32 %s21, 1
      %s29 = ssub.s32 %s21, %s28
      %p30 = scmp.eq.s32.totalorder %s29, 0
      %s32 = sadd.s32 %s31, 1
      %s33 = scalar_select %p30, %s31, %s32
      %p36 = pneg %p30
      %p37 = scmp.eq.s32.totalorder %s21, 1
      %p38 = por %p36, %p37
      %p39 = scmp.ne.s32.totalorder %s31, %s34
      %p40 = scmp.eq.s32.totalorder %s21, 0
      %p41 = por %p39, %p40
      %p42 = scmp.ne.s32.totalorder %s31, %s34
      %p43 = scmp.eq.s32.totalorder %s26, 1
      %p44 = por %p42, %p43
      %p45 = scmp.ne.s32.totalorder %s34, %s35
      %p46 = scmp.eq.s32.totalorder %s26, 0
      %p47 = por %p45, %p46
      %p48 = scmp.ne.s32.totalorder %s34, %s35
      %p49 = scmp.eq.s32.totalorder %s27, 1
      %p50 = por %p48, %p49
      %p52 = scmp.ne.s32.totalorder %s35, %s51
      %p53 = scmp.eq.s32.totalorder %s27, 0
      %p54 = por %p52, %p53
      %s56 = sadd.s32 %s55, 1
      %p59 = scmp.eq.s32.totalorder %s21, 1
      %p60 = scmp.ne.s32.totalorder %s55, %s57
      %p61 = scmp.eq.s32.totalorder %s21, 0
      %p62 = por %p60, %p61
      %p63 = scmp.ne.s32.totalorder %s55, %s57
      %p64 = scmp.eq.s32.totalorder %s26, 1
      %p65 = por %p63, %p64
      %p66 = scmp.ne.s32.totalorder %s57, %s58
      %p67 = scmp.eq.s32.totalorder %s26, 0
      %p68 = por %p66, %p67
      %p69 = scmp.ne.s32.totalorder %s57, %s58
      %p70 = scmp.eq.s32.totalorder %s27, 1
      %p71 = por %p69, %p70
      %p73 = scmp.ne.s32.totalorder %s58, %s72
      %p74 = scmp.eq.s32.totalorder %s27, 0
      %p75 = por %p73, %p74
      %s77 = sadd.s32 %s76, 1
      %p80 = scmp.eq.s32.totalorder %s21, 1
      %p81 = scmp.ne.s32.totalorder %s76, %s78
      %p82 = scmp.eq.s32.totalorder %s21, 0
      %p83 = por %p81, %p82
      %p84 = scmp.ne.s32.totalorder %s76, %s78
      %p85 = scmp.eq.s32.totalorder %s26, 1
      %p86 = por %p84, %p85
      %p87 = scmp.ne.s32.totalorder %s78, %s79
      %p88 = scmp.eq.s32.totalorder %s26, 0
      %p89 = por %p87, %p88
      %p90 = scmp.ne.s32.totalorder %s78, %s79
      %p91 = scmp.eq.s32.totalorder %s27, 1
      %p92 = por %p90, %p91
      %p94 = scmp.ne.s32.totalorder %s79, %s93
      %p95 = scmp.eq.s32.totalorder %s27, 0
      %p96 = por %p94, %p95
      %s98 = sadd.s32 %s97, 1
      %p101 = scmp.eq.s32.totalorder %s21, 1
      %p102 = scmp.ne.s32.totalorder %s97, %s99
      %p103 = scmp.eq.s32.totalorder %s21, 0
      %p104 = por %p102, %p103
      %p105 = scmp.ne.s32.totalorder %s97, %s99
      %p106 = scmp.eq.s32.totalorder %s26, 1
      %p107 = por %p105, %p106
      %p108 = scmp.ne.s32.totalorder %s99, %s100
      %p109 = scmp.eq.s32.totalorder %s26, 0
      %p110 = por %p108, %p109
      %p111 = scmp.ne.s32.totalorder %s99, %s100
      %p112 = scmp.eq.s32.totalorder %s27, 1
      %p113 = por %p111, %p112
      %p115 = scmp.ne.s32.totalorder %s100, %s114
      %p116 = scmp.eq.s32.totalorder %s27, 0
      %p117 = por %p115, %p116
      %s119 = sadd.s32 %s118, 1
      %p122 = scmp.eq.s32.totalorder %s21, 1
      %p123 = scmp.ne.s32.totalorder %s118, %s120
      %p124 = scmp.eq.s32.totalorder %s21, 0
      %p125 = por %p123, %p124
      %p126 = scmp.ne.s32.totalorder %s118, %s120
      %p127 = scmp.eq.s32.totalorder %s26, 1
      %p128 = por %p126, %p127
      %p129 = scmp.ne.s32.totalorder %s120, %s121
      %p130 = scmp.eq.s32.totalorder %s26, 0
      %p131 = por %p129, %p130
      %p132 = scmp.ne.s32.totalorder %s120, %s121
      %p133 = scmp.eq.s32.totalorder %s27, 1
      %p134 = por %p132, %p133
      %p136 = scmp.ne.s32.totalorder %s121, %s135
      %p137 = scmp.eq.s32.totalorder %s27, 0
      %p138 = por %p136, %p137
      %s140 = sadd.s32 %s139, 1
      %p143 = scmp.eq.s32.totalorder %s21, 1
      %p144 = scmp.ne.s32.totalorder %s139, %s141
      %p145 = scmp.eq.s32.totalorder %s21, 0
      %p146 = por %p144, %p145
      %p147 = scmp.ne.s32.totalorder %s139, %s141
      %p148 = scmp.eq.s32.totalorder %s26, 1
      %p149 = por %p147, %p148
      %p150 = scmp.ne.s32.totalorder %s141, %s142
      %p151 = scmp.eq.s32.totalorder %s26, 0
      %p152 = por %p150, %p151
      %p153 = scmp.ne.s32.totalorder %s141, %s142
      %p154 = scmp.eq.s32.totalorder %s27, 1
      %p155 = por %p153, %p154
      %p157 = scmp.ne.s32.totalorder %s142, %s156
      %p158 = scmp.eq.s32.totalorder %s27, 0
      %p159 = por %p157, %p158
      %s161 = sadd.s32 %s160, 1
      %p164 = scmp.eq.s32.totalorder %s21, 1
      %p165 = scmp.ne.s32.totalorder %s160, %s162
      %p166 = scmp.eq.s32.totalorder %s21, 0
      %p167 = por %p165, %p166
      %p168 = scmp.ne.s32.totalorder %s160, %s162
      %p169 = scmp.eq.s32.totalorder %s26, 1
      %p170 = por %p168, %p169
      %p171 = scmp.ne.s32.totalorder %s162, %s163
      %p172 = scmp.eq.s32.totalorder %s26, 0
      %p173 = por %p171, %p172
      %p174 = scmp.ne.s32.totalorder %s162, %s163
      %p175 = scmp.eq.s32.totalorder %s27, 1
      %p176 = por %p174, %p175
      %p178 = scmp.ne.s32.totalorder %s163, %s177
      %p179 = scmp.eq.s32.totalorder %s27, 0
      %p180 = por %p178, %p179
      %s181 = ssub.s32 %s21, %s28
      %p182 = scmp.eq.s32.totalorder %s181, 0
      %s184 = sadd.s32 %s183, 1
      %s185 = scalar_select %p182, %s183, %s184
      %p188 = pneg %p182
      %p189 = scmp.eq.s32.totalorder %s21, 1
      %p190 = por %p188, %p189
      %p191 = scmp.ne.s32.totalorder %s183, %s186
      %p192 = scmp.eq.s32.totalorder %s21, 0
      %p193 = por %p191, %p192
      %p194 = scmp.ne.s32.totalorder %s183, %s186
      %p195 = scmp.eq.s32.totalorder %s26, 1
      %p196 = por %p194, %p195
      %p197 = scmp.ne.s32.totalorder %s186, %s187
      %p198 = scmp.eq.s32.totalorder %s26, 0
      %p199 = por %p197, %p198
      %p200 = scmp.ne.s32.totalorder %s186, %s187
      %p201 = scmp.eq.s32.totalorder %s27, 1
      %p202 = por %p200, %p201
      %p204 = scmp.ne.s32.totalorder %s187, %s203
      %p205 = scmp.eq.s32.totalorder %s27, 0
      %p206 = por %p204, %p205
      %p207 = scmp.le.s32.totalorder 1, %s21
      %p208 = scmp.lt.s32.totalorder %s21, 3
      %p209 = pnand %p207, %p208
      %p210 = pneg %p209
      // Predicated region
      $region9: #{tpu_custom_call.1} parent=5 // pred_check
        _
      $region10: #{tpu_custom_call.1} parent=5 // pred_check_branch
        %212 = sbr.rel (%p209) target = $region12
      $region11: #{tpu_custom_call.1} parent=5 // pred_region
        %s213 = ssub.s32 %s21, 1
        // Predicated region
        $region13: #{tpu_custom_call.1} parent=11 // pred_check
          %p214 = pneg %p68
        $region14: #{tpu_custom_call.1} parent=11 // pred_check_branch
          %216 = sbr.rel (%p214) target = $region16
        $region15: #{tpu_custom_call.1} parent=11 // pred_region
          %218 = vsyncadd [#allocation6], 0
          %s220 = sshll.u32 %s1, 4
          %s221 = int_to_ptr.hbm [resolvable:$true] %s220
          %s222 = sshll.u32 [#allocation5], 4
          %s223 = int_to_ptr.vmem [resolvable:$true] %s222
          %225 = dma.hbm_to_vmem [thread:$0]  %s221, 16, %s223, [#allocation6]
        $region16: #{tpu_custom_call.1} parent=11 // pred_fallthru
          _
        // Predicated region
        $region17: #{tpu_custom_call.1} parent=11 // pred_check
          %p226 = pneg %p89
        $region18: #{tpu_custom_call.1} parent=11 // pred_check_branch
          %228 = sbr.rel (%p226) target = $region20
        $region19: #{tpu_custom_call.1} parent=11 // pred_region
          _
        $region20: #{tpu_custom_call.1} parent=11 // pred_fallthru
          _
        // Predicated region
        $region21: #{tpu_custom_call.1} parent=11 // pred_check
          %p229 = pneg %p110
        $region22: #{tpu_custom_call.1} parent=11 // pred_check_branch
          %231 = sbr.rel (%p229) target = $region24
        $region23: #{tpu_custom_call.1} parent=11 // pred_region
          %233 = vsyncadd [#allocation6], 0
          %s234 = sshll.u32 %s3, 4
          %s235 = int_to_ptr.hbm [resolvable:$true] %s234
          %s236 = sshll.u32 [#allocation7], 4
          %s237 = int_to_ptr.vmem [resolvable:$true] %s236
          %242 = dma.hbm_to_vmem [thread:$0]  %s235, 4096, %s237, [#allocation6], 256, 256, 16
        $region24: #{tpu_custom_call.1} parent=11 // pred_fallthru
          _
        // Predicated region
        $region25: #{tpu_custom_call.1} parent=11 // pred_check
          %p243 = pneg %p131
        $region26: #{tpu_custom_call.1} parent=11 // pred_check_branch
          %245 = sbr.rel (%p243) target = $region28
        $region27: #{tpu_custom_call.1} parent=11 // pred_region
          %247 = vsyncadd [#allocation9], 0
          %s249 = sshll.u32 %s4, 4
          %s250 = int_to_ptr.hbm [resolvable:$true] %s249
          %s251 = sshll.u32 [#allocation8], 4
          %s252 = int_to_ptr.vmem [resolvable:$true] %s251
          %254 = dma.hbm_to_vmem [thread:$0]  %s250, 64, %s252, [#allocation9]
        $region28: #{tpu_custom_call.1} parent=11 // pred_fallthru
          _
        // Predicated region
        $region29: #{tpu_custom_call.1} parent=11 // pred_check
          %p255 = pneg %p152
        $region30: #{tpu_custom_call.1} parent=11 // pred_check_branch
          %257 = sbr.rel (%p255) target = $region32
        $region31: #{tpu_custom_call.1} parent=11 // pred_region
          %259 = vsyncadd [#allocation9], 0
          %s260 = sshll.u32 %s5, 4
          %s261 = int_to_ptr.hbm [resolvable:$true] %s260
          %s262 = sshll.u32 [#allocation10], 4
          %s263 = int_to_ptr.vmem [resolvable:$true] %s262
          %268 = dma.hbm_to_vmem [thread:$0]  %s261, 4096, %s263, [#allocation9], 64, 64, 4
        $region32: #{tpu_custom_call.1} parent=11 // pred_fallthru
          _
        // Predicated region
        $region33: #{tpu_custom_call.1} parent=11 // pred_check
          %p269 = pneg %p173
        $region34: #{tpu_custom_call.1} parent=11 // pred_check_branch
          %271 = sbr.rel (%p269) target = $region36
        $region35: #{tpu_custom_call.1} parent=11 // pred_region
          _
        $region36: #{tpu_custom_call.1} parent=11 // pred_fallthru
          _
      $region12: #{tpu_custom_call.1} parent=5 // pred_fallthru
        _
      %p272 = scmp.lt.s32.totalorder %s21, 2
      // Predicated region
      $region37: #{tpu_custom_call.1} parent=5 // pred_check
        %p273 = pneg %p272
      $region38: #{tpu_custom_call.1} parent=5 // pred_check_branch
        %275 = sbr.rel (%p273) target = $region40
      $region39: #{tpu_custom_call.1} parent=5 // pred_region
        // Predicated region
        $region41: #{tpu_custom_call.1} parent=39 // pred_check
          %p276 = pneg %p41
        $region42: #{tpu_custom_call.1} parent=39 // pred_check_branch
          %278 = sbr.rel (%p276) target = $region44
        $region43: #{tpu_custom_call.1} parent=39 // pred_region
          %s279 = sand.u32 %s31, 1
          %s280 = scalar_lea.sflag [#allocation3], %s279
          %s281 = sand.u32 %s31, 1
          %s282 = smul.addr %s281, 48
          %s283 = scalar_lea.vmem [#allocation2], %s282
          %s284 = smul.u32 6, %s21
          %s285 = ssub.s32 11, %s284
          %p286 = scmp.lt.s32.totalorder %s285, 6
          %s287 = scalar_select %p286, %s285, 6
          %s288 = smul.u32 8, %s287
          %s289 = ssub.s32 48, %s288
          %s290 = sshll.u32 %s289, 4
          %291 = vsyncadd %s280, %s290
          %p292 = scmp.ne.s32.totalorder 0, %s288
          %s293 = smul.addr %s284, 8
          %s294 = scalar_lea.hbm %s0, %s293
          %s295 = smul.u32 8, %s287
          %s296 = sshll.u32 %s294, 4
          %s297 = int_to_ptr.hbm [resolvable:$true] %s296
          %s298 = sshll.u32 %s283, 4
          %s299 = int_to_ptr.vmem [resolvable:$true] %s298
          %s300 = sshll.u32 %s295, 4
          %304 = dma.hbm_to_vmem [thread:$0]  (%p292), %s297, %s300, %s299, %s280, 128, 128, 8
        $region44: #{tpu_custom_call.1} parent=39 // pred_fallthru
          _
      $region40: #{tpu_custom_call.1} parent=5 // pred_fallthru
        _
      %p305 = scmp.le.s32.totalorder 1, %s21
      %p306 = scmp.lt.s32.totalorder %s21, 3
      %p307 = pnand %p305, %p306
      %p308 = pneg %p307
      // Predicated region
      $region45: #{tpu_custom_call.1} parent=5 // pred_check
        _
      $region46: #{tpu_custom_call.1} parent=5 // pred_check_branch
        %310 = sbr.rel (%p307) target = $region48
      $region47: #{tpu_custom_call.1} parent=5 // pred_region
        %s311 = ssub.s32 %s21, 1
        %s312 = sand.u32 %s34, 1
        %s313 = scalar_lea.sflag [#allocation3], %s312
        %s314 = sand.u32 %s34, 1
        %s315 = smul.addr %s314, 48
        %s316 = scalar_lea.vmem [#allocation2], %s315
        // Predicated region
        $region49: #{tpu_custom_call.1} parent=47 // pred_check
          %p317 = pneg %p47
        $region50: #{tpu_custom_call.1} parent=47 // pred_check_branch
          %319 = sbr.rel (%p317) target = $region52
        $region51: #{tpu_custom_call.1} parent=47 // pred_region
          %321 = dma.done %s313, 768
        $region52: #{tpu_custom_call.1} parent=47 // pred_fallthru
          _
        // Predicated region
        $region53: #{tpu_custom_call.1} parent=47 // pred_check
          %p322 = pneg %p68
        $region54: #{tpu_custom_call.1} parent=47 // pred_check_branch
          %324 = sbr.rel (%p322) target = $region56
        $region55: #{tpu_custom_call.1} parent=47 // pred_region
          %326 = dma.done [#allocation6], 16
        $region56: #{tpu_custom_call.1} parent=47 // pred_fallthru
          _
        // Predicated region
        $region57: #{tpu_custom_call.1} parent=47 // pred_check
          %p327 = pneg %p110
        $region58: #{tpu_custom_call.1} parent=47 // pred_check_branch
          %329 = sbr.rel (%p327) target = $region60
        $region59: #{tpu_custom_call.1} parent=47 // pred_region
          %331 = dma.done [#allocation6], 4096
        $region60: #{tpu_custom_call.1} parent=47 // pred_fallthru
          _
        // Predicated region
        $region61: #{tpu_custom_call.1} parent=47 // pred_check
          %p332 = pneg %p131
        $region62: #{tpu_custom_call.1} parent=47 // pred_check_branch
          %334 = sbr.rel (%p332) target = $region64
        $region63: #{tpu_custom_call.1} parent=47 // pred_region
          %336 = dma.done [#allocation9], 64
        $region64: #{tpu_custom_call.1} parent=47 // pred_fallthru
          _
        // Predicated region
        $region65: #{tpu_custom_call.1} parent=47 // pred_check
          %p337 = pneg %p152
        $region66: #{tpu_custom_call.1} parent=47 // pred_check_branch
          %339 = sbr.rel (%p337) target = $region68
        $region67: #{tpu_custom_call.1} parent=47 // pred_region
          %341 = dma.done [#allocation9], 4096
        $region68: #{tpu_custom_call.1} parent=47 // pred_fallthru
          _
        %s342 = sand.u32 %s34, 1
        %s343 = scalar_lea.sflag [#allocation3], %s342
        %s344 = sand.u32 %s34, 1
        %s345 = smul.addr %s344, 48
        %s346 = scalar_lea.vmem [#allocation2], %s345
        %p347 = pneg %p47
        %p348 = pneg %p44
        %p349 = pneg %p68
        %p350 = pneg %p65
        %p351 = pneg %p89
        %p352 = pneg %p86
        %p353 = pneg %p110
        %p354 = pneg %p107
        %p355 = pneg %p131
        %p356 = pneg %p128
        %p357 = pneg %p152
        %p358 = pneg %p149
        %p359 = pneg %p173
        %p360 = pneg %p170
        %p361 = pneg %p199
        %p362 = pneg %p196
        %s363 = sand.u32 %s186, 1
        %s364 = scalar_lea.sflag [#allocation4], %s363
        %s365 = sand.u32 %s186, 1
        %s366 = smul.addr %s365, 48
        %s367 = scalar_lea.vmem [#allocation11], %s366
        %s368 = smul.u32 6, %s26
        %s369 = ssub.s32 11, %s368
        %p370 = scmp.lt.s32.totalorder %s369, 6
        %s371 = scalar_select %p370, %s369, 6
        %s372 = smul.u32 8, %s371
        %s373 = smul.u32 6, %s26
        %s374 = ssub.s32 11, %s373
        %p375 = scmp.lt.s32.totalorder %s374, 6
        %s376 = scalar_select %p375, %s374, 6
        %s377 = smul.u32 8, %s376
        %v378 = vld [vmem:[%s316] sm:$0xff]
        %v379 = vld [vmem:[%s316 + $0x8] sm:$0xff]
        %v380 = vld [vmem:[%s316 + $0x10] sm:$0xff]
        %v381 = vld [vmem:[%s316 + $0x18] sm:$0xff]
        %v382 = vld [vmem:[%s316 + $0x20] sm:$0xff]
        %v383 = vld [vmem:[%s316 + $0x28] sm:$0xff]
        %384 = vadd.xlane.f32.xlu0 %v378
        %v385 = vpop.xlane.xlu0 %384
        %386 = vadd.xlane.f32.xlu0 %v379
        %v387 = vpop.xlane.xlu0 %386
        %388 = vadd.xlane.f32.xlu0 %v380
        %v389 = vpop.xlane.xlu0 %388
        %390 = vadd.xlane.f32.xlu0 %v381
        %v391 = vpop.xlane.xlu0 %390
        %392 = vadd.xlane.f32.xlu0 %v382
        %v393 = vpop.xlane.xlu0 %392
        %394 = vadd.xlane.f32.xlu0 %v383
        %v395 = vpop.xlane.xlu0 %394
        %v396 = vrcp.pop 128.0
        %v397 = vmul.f32 128.0, %v396
        %v398 = vsub.f32 1.0, %v397
        %v399 = vmul.f32 %v396, %v398
        %v400 = vadd.f32 %v396, %v399
        %vm401 = vweird.f32 %v396
        %v402 = vsel %vm401, %v396, %v400
        %v403 = vmul.f32 %v385, %v402
        %v404 = vmul.f32 %v387, %v402
        %v405 = vmul.f32 %v389, %v402
        %v406 = vmul.f32 %v391, %v402
        %v407 = vmul.f32 %v393, %v402
        %v408 = vmul.f32 %v395, %v402
        %v409 = vsub.f32 %v378, %v403
        %v410 = vsub.f32 %v379, %v404
        %v411 = vsub.f32 %v380, %v405
        %v412 = vsub.f32 %v381, %v406
        %v413 = vsub.f32 %v382, %v407
        %v414 = vsub.f32 %v383, %v408
        %v415 = vmul.f32 %v409, %v409
        %v416 = vmul.f32 %v410, %v410
        %v417 = vmul.f32 %v411, %v411
        %v418 = vmul.f32 %v412, %v412
        %v419 = vmul.f32 %v413, %v413
        %v420 = vmul.f32 %v414, %v414
        %421 = vadd.xlane.f32.xlu0 %v415
        %v422 = vpop.xlane.xlu0 %421
        %423 = vadd.xlane.f32.xlu0 %v416
        %v424 = vpop.xlane.xlu0 %423
        %425 = vadd.xlane.f32.xlu0 %v417
        %v426 = vpop.xlane.xlu0 %425
        %427 = vadd.xlane.f32.xlu0 %v418
        %v428 = vpop.xlane.xlu0 %427
        %429 = vadd.xlane.f32.xlu0 %v419
        %v430 = vpop.xlane.xlu0 %429
        %431 = vadd.xlane.f32.xlu0 %v420
        %v432 = vpop.xlane.xlu0 %431
        %v433 = vmul.f32 %v422, %v402
        %v434 = vmul.f32 %v424, %v402
        %v435 = vmul.f32 %v426, %v402
        %v436 = vmul.f32 %v428, %v402
        %v437 = vmul.f32 %v430, %v402
        %v438 = vmul.f32 %v432, %v402
        %v439 = vadd.f32 %v433, 1e-05
        %v440 = vadd.f32 %v434, 1e-05
        %v441 = vadd.f32 %v435, 1e-05
        %v442 = vadd.f32 %v436, 1e-05
        %v443 = vadd.f32 %v437, 1e-05
        %v444 = vadd.f32 %v438, 1e-05
        %v445 = vrsqrt.pop %v439
        %v446 = vmul.f32 %v445, %v439
        %v447 = vmul.f32 %v446, %v445
        %v448 = vmul.f32 0.5, %v447
        %v449 = vsub.f32 1.5, %v448
        %v450 = vmul.f32 %v445, %v449
        %vm451 = vweird.f32 %v439
        %vm452 = vweird.f32 %v445
        %vm453 = vmor %vm451, %vm452
        %v454 = vsel %vm453, %v445, %v450
        %v455 = vrsqrt.pop %v440
        %v456 = vmul.f32 %v455, %v440
        %v457 = vmul.f32 %v456, %v455
        %v458 = vmul.f32 0.5, %v457
        %v459 = vsub.f32 1.5, %v458
        %v460 = vmul.f32 %v455, %v459
        %vm461 = vweird.f32 %v440
        %vm462 = vweird.f32 %v455
        %vm463 = vmor %vm461, %vm462
        %v464 = vsel %vm463, %v455, %v460
        %v465 = vrsqrt.pop %v441
        %v466 = vmul.f32 %v465, %v441
        %v467 = vmul.f32 %v466, %v465
        %v468 = vmul.f32 0.5, %v467
        %v469 = vsub.f32 1.5, %v468
        %v470 = vmul.f32 %v465, %v469
        %vm471 = vweird.f32 %v441
        %vm472 = vweird.f32 %v465
        %vm473 = vmor %vm471, %vm472
        %v474 = vsel %vm473, %v465, %v470
        %v475 = vrsqrt.pop %v442
        %v476 = vmul.f32 %v475, %v442
        %v477 = vmul.f32 %v476, %v475
        %v478 = vmul.f32 0.5, %v477
        %v479 = vsub.f32 1.5, %v478
        %v480 = vmul.f32 %v475, %v479
        %vm481 = vweird.f32 %v442
        %vm482 = vweird.f32 %v475
        %vm483 = vmor %vm481, %vm482
        %v484 = vsel %vm483, %v475, %v480
        %v485 = vrsqrt.pop %v443
        %v486 = vmul.f32 %v485, %v443
        %v487 = vmul.f32 %v486, %v485
        %v488 = vmul.f32 0.5, %v487
        %v489 = vsub.f32 1.5, %v488
        %v490 = vmul.f32 %v485, %v489
        %vm491 = vweird.f32 %v443
        %vm492 = vweird.f32 %v485
        %vm493 = vmor %vm491, %vm492
        %v494 = vsel %vm493, %v485, %v490
        %v495 = vrsqrt.pop %v444
        %v496 = vmul.f32 %v495, %v444
        %v497 = vmul.f32 %v496, %v495
        %v498 = vmul.f32 0.5, %v497
        %v499 = vsub.f32 1.5, %v498
        %v500 = vmul.f32 %v495, %v499
        %vm501 = vweird.f32 %v444
        %vm502 = vweird.f32 %v495
        %vm503 = vmor %vm501, %vm502
        %v504 = vsel %vm503, %v495, %v500
        %v505 = vmul.f32 %v409, %v454
        %v506 = vmul.f32 %v410, %v464
        %v507 = vmul.f32 %v411, %v474
        %v508 = vmul.f32 %v412, %v484
        %v509 = vmul.f32 %v413, %v494
        %v510 = vmul.f32 %v414, %v504
        %v511 = vld [vmem:[#allocation5] sm:$0x1]
        %v513 = vperm.slane %v511, 0
        %v515 = vmul.f32 %v505, %v513
        %v516 = vmul.f32 %v506, %v513
        %v517 = vmul.f32 %v507, %v513
        %v518 = vmul.f32 %v508, %v513
        %v519 = vmul.f32 %v509, %v513
        %v520 = vmul.f32 %v510, %v513
        %v521 = vld [vmem:[%s2] sm:$0x1]
        %v523 = vperm.slane %v521, 0
        %v525 = vadd.f32 %v515, %v523
        %v526 = vadd.f32 %v516, %v523
        %v527 = vadd.f32 %v517, %v523
        %v528 = vadd.f32 %v518, %v523
        %v529 = vadd.f32 %v519, %v523
        %v530 = vadd.f32 %v520, %v523
        %v531 = vpack.c.bf16 %v526, %v525
        %v532 = vpack.c.bf16 %v528, %v527
        %v533 = vpack.c.bf16 %v530, %v529
        %v534 = vld [vmem:[#allocation7] sm:$0xff]
        %v535 = vld [vmem:[#allocation7 + $0x8] sm:$0xff]
        %v536 = vld [vmem:[#allocation7 + $0x10] sm:$0xff]
        %v537 = vld [vmem:[#allocation7 + $0x18] sm:$0xff]
        %v538 = vld [vmem:[#allocation7 + $0x20] sm:$0xff]
        %v539 = vld [vmem:[#allocation7 + $0x28] sm:$0xff]
        %v540 = vld [vmem:[#allocation7 + $0x30] sm:$0xff]
        %v541 = vld [vmem:[#allocation7 + $0x38] sm:$0xff]
        %v542 = vld [vmem:[#allocation7 + $0x40] sm:$0xff]
        %v543 = vld [vmem:[#allocation7 + $0x48] sm:$0xff]
        %v544 = vld [vmem:[#allocation7 + $0x50] sm:$0xff]
        %v545 = vld [vmem:[#allocation7 + $0x58] sm:$0xff]
        %v546 = vld [vmem:[#allocation7 + $0x60] sm:$0xff]
        %v547 = vld [vmem:[#allocation7 + $0x68] sm:$0xff]
        %v548 = vld [vmem:[#allocation7 + $0x70] sm:$0xff]
        %v549 = vld [vmem:[#allocation7 + $0x78] sm:$0xff]
        %v550 = vld [vmem:[#allocation7 + $0x80] sm:$0xff]
        %v551 = vld [vmem:[#allocation7 + $0x88] sm:$0xff]
        %v552 = vld [vmem:[#allocation7 + $0x90] sm:$0xff]
        %v553 = vld [vmem:[#allocation7 + $0x98] sm:$0xff]
        %v554 = vld [vmem:[#allocation7 + $0xa0] sm:$0xff]
        %v555 = vld [vmem:[#allocation7 + $0xa8] sm:$0xff]
        %v556 = vld [vmem:[#allocation7 + $0xb0] sm:$0xff]
        %v557 = vld [vmem:[#allocation7 + $0xb8] sm:$0xff]
        %v558 = vld [vmem:[#allocation7 + $0xc0] sm:$0xff]
        %v559 = vld [vmem:[#allocation7 + $0xc8] sm:$0xff]
        %v560 = vld [vmem:[#allocation7 + $0xd0] sm:$0xff]
        %v561 = vld [vmem:[#allocation7 + $0xd8] sm:$0xff]
        %v562 = vld [vmem:[#allocation7 + $0xe0] sm:$0xff]
        %v563 = vld [vmem:[#allocation7 + $0xe8] sm:$0xff]
        %v564 = vld [vmem:[#allocation7 + $0xf0] sm:$0xff]
        %v565 = vld [vmem:[#allocation7 + $0xf8] sm:$0xff]
        %v566 = vld [vmem:[#allocation8] sm:$0xf]
        %v568 = vperm.slane %v566, 0
        %v569 = vperm.slane %v566, 1
        %v570 = vperm.slane %v566, 2
        %v571 = vperm.slane %v566, 3
        %v608 = vunpack.c.l.b16 %v534
        %v609 = vunpack.c.h.b16 %v534
        %v610 = vunpack.c.l.b16 %v535
        %v611 = vunpack.c.h.b16 %v535
        %v612 = vunpack.c.l.b16 %v536
        %v613 = vunpack.c.h.b16 %v536
        %v614 = vunpack.c.l.b16 %v537
        %v615 = vunpack.c.h.b16 %v537
        %v616 = vunpack.c.l.b16 %v538
        %v617 = vunpack.c.h.b16 %v538
        %v618 = vunpack.c.l.b16 %v539
        %v619 = vunpack.c.h.b16 %v539
        %v620 = vunpack.c.l.b16 %v540
        %v621 = vunpack.c.h.b16 %v540
        %v622 = vunpack.c.l.b16 %v541
        %v623 = vunpack.c.h.b16 %v541
        %v624 = vunpack.c.l.b16 %v542
        %v625 = vunpack.c.h.b16 %v542
        %v626 = vunpack.c.l.b16 %v543
        %v627 = vunpack.c.h.b16 %v543
        %v628 = vunpack.c.l.b16 %v544
        %v629 = vunpack.c.h.b16 %v544
        %v630 = vunpack.c.l.b16 %v545
        %v631 = vunpack.c.h.b16 %v545
        %v632 = vunpack.c.l.b16 %v546
        %v633 = vunpack.c.h.b16 %v546
        %v634 = vunpack.c.l.b16 %v547
        %v635 = vunpack.c.h.b16 %v547
        %v636 = vunpack.c.l.b16 %v548
        %v637 = vunpack.c.h.b16 %v548
        %v638 = vunpack.c.l.b16 %v549
        %v639 = vunpack.c.h.b16 %v549
        %v640 = vunpack.c.l.b16 %v550
        %v641 = vunpack.c.h.b16 %v550
        %v642 = vunpack.c.l.b16 %v551
        %v643 = vunpack.c.h.b16 %v551
        %v644 = vunpack.c.l.b16 %v552
        %v645 = vunpack.c.h.b16 %v552
        %v646 = vunpack.c.l.b16 %v553
        %v647 = vunpack.c.h.b16 %v553
        %v648 = vunpack.c.l.b16 %v554
        %v649 = vunpack.c.h.b16 %v554
        %v650 = vunpack.c.l.b16 %v555
        %v651 = vunpack.c.h.b16 %v555
        %v652 = vunpack.c.l.b16 %v556
        %v653 = vunpack.c.h.b16 %v556
        %v654 = vunpack.c.l.b16 %v557
        %v655 = vunpack.c.h.b16 %v557
        %v656 = vunpack.c.l.b16 %v558
        %v657 = vunpack.c.h.b16 %v558
        %v658 = vunpack.c.l.b16 %v559
        %v659 = vunpack.c.h.b16 %v559
        %v660 = vunpack.c.l.b16 %v560
        %v661 = vunpack.c.h.b16 %v560
        %v662 = vunpack.c.l.b16 %v561
        %v663 = vunpack.c.h.b16 %v561
        %v664 = vunpack.c.l.b16 %v562
        %v665 = vunpack.c.h.b16 %v562
        %v666 = vunpack.c.l.b16 %v563
        %v667 = vunpack.c.h.b16 %v563
        %v668 = vunpack.c.l.b16 %v564
        %v669 = vunpack.c.h.b16 %v564
        %v670 = vunpack.c.l.b16 %v565
        %v671 = vunpack.c.h.b16 %v565
        %v672 = vpack.c.b16 %v612, %v608
        %v673 = vpack.c.b16 %v613, %v609
        %v674 = vpack.c.b16 %v614, %v610
        %v675 = vpack.c.b16 %v615, %v611
        %v676 = vpack.c.b16 %v620, %v616
        %v677 = vpack.c.b16 %v621, %v617
        %v678 = vpack.c.b16 %v622, %v618
        %v679 = vpack.c.b16 %v623, %v619
        %v680 = vpack.c.b16 %v628, %v624
        %v681 = vpack.c.b16 %v629, %v625
        %v682 = vpack.c.b16 %v630, %v626
        %v683 = vpack.c.b16 %v631, %v627
        %v684 = vpack.c.b16 %v636, %v632
        %v685 = vpack.c.b16 %v637, %v633
        %v686 = vpack.c.b16 %v638, %v634
        %v687 = vpack.c.b16 %v639, %v635
        %v688 = vpack.c.b16 %v644, %v640
        %v689 = vpack.c.b16 %v645, %v641
        %v690 = vpack.c.b16 %v646, %v642
        %v691 = vpack.c.b16 %v647, %v643
        %v692 = vpack.c.b16 %v652, %v648
        %v693 = vpack.c.b16 %v653, %v649
        %v694 = vpack.c.b16 %v654, %v650
        %v695 = vpack.c.b16 %v655, %v651
        %v696 = vpack.c.b16 %v660, %v656
        %v697 = vpack.c.b16 %v661, %v657
        %v698 = vpack.c.b16 %v662, %v658
        %v699 = vpack.c.b16 %v663, %v659
        %v700 = vpack.c.b16 %v668, %v664
        %v701 = vpack.c.b16 %v669, %v665
        %v702 = vpack.c.b16 %v670, %v666
        %v703 = vpack.c.b16 %v671, %v667
        %736 = vmatpush.bf16.msra.mxu0 %v700
        %737 = vmatpush.bf16.msra.mxu0 %v696
        %738 = vmatpush.bf16.msra.mxu0 %v692
        %739 = vmatpush.bf16.msra.mxu0 %v688
        %740 = vmatpush.bf16.msra.mxu0 %v684
        %741 = vmatpush.bf16.msra.mxu0 %v680
        %742 = vmatpush.bf16.msra.mxu0 %v676
        %743 = vmatpush.bf16.msra.mxu0 %v672
        %744 = vmatmul.bf16.gmra.mxu0 %v531
        %v745 = vpop.f32.mrf.mxu0
        %v746 = vadd.f32 %v568, %v745
        %v747 = vpop.f32.mrf.mxu0
        %v748 = vadd.f32 %v568, %v747
        %749 = vmatmul.bf16.gmra.mxu0 %v532
        %v750 = vpop.f32.mrf.mxu0
        %v751 = vadd.f32 %v568, %v750
        %v752 = vpop.f32.mrf.mxu0
        %v753 = vadd.f32 %v568, %v752
        %754 = vmatmul.bf16.gmra.mxu0 %v533
        %v755 = vpop.f32.mrf.mxu0
        %v756 = vadd.f32 %v568, %v755
        %v757 = vpop.f32.mrf.mxu0
        %v758 = vadd.f32 %v568, %v757
        %759 = vdwg.mxu0
        %760 = vmatpush.bf16.msra.mxu0 %v701
        %761 = vmatpush.bf16.msra.mxu0 %v697
        %762 = vmatpush.bf16.msra.mxu0 %v693
        %763 = vmatpush.bf16.msra.mxu0 %v689
        %764 = vmatpush.bf16.msra.mxu0 %v685
        %765 = vmatpush.bf16.msra.mxu0 %v681
        %766 = vmatpush.bf16.msra.mxu0 %v677
        %767 = vmatpush.bf16.msra.mxu0 %v673
        %768 = vmatmul.bf16.gmra.mxu0 %v531
        %v769 = vpop.f32.mrf.mxu0
        %v770 = vadd.f32 %v569, %v769
        %v771 = vpop.f32.mrf.mxu0
        %v772 = vadd.f32 %v569, %v771
        %773 = vmatmul.bf16.gmra.mxu0 %v532
        %v774 = vpop.f32.mrf.mxu0
        %v775 = vadd.f32 %v569, %v774
        %v776 = vpop.f32.mrf.mxu0
        %v777 = vadd.f32 %v569, %v776
        %778 = vmatmul.bf16.gmra.mxu0 %v533
        %v779 = vpop.f32.mrf.mxu0
        %v780 = vadd.f32 %v569, %v779
        %v781 = vpop.f32.mrf.mxu0
        %v782 = vadd.f32 %v569, %v781
        %783 = vdwg.mxu0
        %784 = vmatpush.bf16.msra.mxu0 %v702
        %785 = vmatpush.bf16.msra.mxu0 %v698
        %786 = vmatpush.bf16.msra.mxu0 %v694
        %787 = vmatpush.bf16.msra.mxu0 %v690
        %788 = vmatpush.bf16.msra.mxu0 %v686
        %789 = vmatpush.bf16.msra.mxu0 %v682
        %790 = vmatpush.bf16.msra.mxu0 %v678
        %791 = vmatpush.bf16.msra.mxu0 %v674
        %792 = vmatmul.bf16.gmra.mxu0 %v531
        %v793 = vpop.f32.mrf.mxu0
        %v794 = vadd.f32 %v570, %v793
        %v795 = vpop.f32.mrf.mxu0
        %v796 = vadd.f32 %v570, %v795
        %797 = vmatmul.bf16.gmra.mxu0 %v532
        %v798 = vpop.f32.mrf.mxu0
        %v799 = vadd.f32 %v570, %v798
        %v800 = vpop.f32.mrf.mxu0
        %v801 = vadd.f32 %v570, %v800
        %802 = vmatmul.bf16.gmra.mxu0 %v533
        %v803 = vpop.f32.mrf.mxu0
        %v804 = vadd.f32 %v570, %v803
        %v805 = vpop.f32.mrf.mxu0
        %v806 = vadd.f32 %v570, %v805
        %807 = vdwg.mxu0
        %808 = vmatpush.bf16.msra.mxu0 %v703
        %809 = vmatpush.bf16.msra.mxu0 %v699
        %810 = vmatpush.bf16.msra.mxu0 %v695
        %811 = vmatpush.bf16.msra.mxu0 %v691
        %812 = vmatpush.bf16.msra.mxu0 %v687
        %813 = vmatpush.bf16.msra.mxu0 %v683
        %814 = vmatpush.bf16.msra.mxu0 %v679
        %815 = vmatpush.bf16.msra.mxu0 %v675
        %816 = vmatmul.bf16.gmra.mxu0 %v531
        %v817 = vpop.f32.mrf.mxu0
        %v818 = vadd.f32 %v571, %v817
        %v819 = vpop.f32.mrf.mxu0
        %v820 = vadd.f32 %v571, %v819
        %821 = vmatmul.bf16.gmra.mxu0 %v532
        %v822 = vpop.f32.mrf.mxu0
        %v823 = vadd.f32 %v571, %v822
        %v824 = vpop.f32.mrf.mxu0
        %v825 = vadd.f32 %v571, %v824
        %826 = vmatmul.bf16.gmra.mxu0 %v533
        %v827 = vpop.f32.mrf.mxu0
        %v828 = vadd.f32 %v571, %v827
        %v829 = vpop.f32.mrf.mxu0
        %v830 = vadd.f32 %v571, %v829
        %831 = vdwg.mxu0
        %v832 = vmul.f32 %v746, 0.5
        %v833 = vmul.f32 %v770, 0.5
        %v834 = vmul.f32 %v794, 0.5
        %v835 = vmul.f32 %v818, 0.5
        %v836 = vmul.f32 %v748, 0.5
        %v837 = vmul.f32 %v772, 0.5
        %v838 = vmul.f32 %v796, 0.5
        %v839 = vmul.f32 %v820, 0.5
        %v840 = vmul.f32 %v751, 0.5
        %v841 = vmul.f32 %v775, 0.5
        %v842 = vmul.f32 %v799, 0.5
        %v843 = vmul.f32 %v823, 0.5
        %v844 = vmul.f32 %v753, 0.5
        %v845 = vmul.f32 %v777, 0.5
        %v846 = vmul.f32 %v801, 0.5
        %v847 = vmul.f32 %v825, 0.5
        %v848 = vmul.f32 %v756, 0.5
        %v849 = vmul.f32 %v780, 0.5
        %v850 = vmul.f32 %v804, 0.5
        %v851 = vmul.f32 %v828, 0.5
        %v852 = vmul.f32 %v758, 0.5
        %v853 = vmul.f32 %v782, 0.5
        %v854 = vmul.f32 %v806, 0.5
        %v855 = vmul.f32 %v830, 0.5
        %v856 = vtanh.pop %v832
        %v857 = vtanh.pop %v833
        %v858 = vtanh.pop %v834
        %v859 = vtanh.pop %v835
        %v860 = vtanh.pop %v836
        %v861 = vtanh.pop %v837
        %v862 = vtanh.pop %v838
        %v863 = vtanh.pop %v839
        %v864 = vtanh.pop %v840
        %v865 = vtanh.pop %v841
        %v866 = vtanh.pop %v842
        %v867 = vtanh.pop %v843
        %v868 = vtanh.pop %v844
        %v869 = vtanh.pop %v845
        %v870 = vtanh.pop %v846
        %v871 = vtanh.pop %v847
        %v872 = vtanh.pop %v848
        %v873 = vtanh.pop %v849
        %v874 = vtanh.pop %v850
        %v875 = vtanh.pop %v851
        %v876 = vtanh.pop %v852
        %v877 = vtanh.pop %v853
        %v878 = vtanh.pop %v854
        %v879 = vtanh.pop %v855
        %v880 = vadd.f32 %v856, 1.0
        %v881 = vadd.f32 %v857, 1.0
        %v882 = vadd.f32 %v858, 1.0
        %v883 = vadd.f32 %v859, 1.0
        %v884 = vadd.f32 %v860, 1.0
        %v885 = vadd.f32 %v861, 1.0
        %v886 = vadd.f32 %v862, 1.0
        %v887 = vadd.f32 %v863, 1.0
        %v888 = vadd.f32 %v864, 1.0
        %v889 = vadd.f32 %v865, 1.0
        %v890 = vadd.f32 %v866, 1.0
        %v891 = vadd.f32 %v867, 1.0
        %v892 = vadd.f32 %v868, 1.0
        %v893 = vadd.f32 %v869, 1.0
        %v894 = vadd.f32 %v870, 1.0
        %v895 = vadd.f32 %v871, 1.0
        %v896 = vadd.f32 %v872, 1.0
        %v897 = vadd.f32 %v873, 1.0
        %v898 = vadd.f32 %v874, 1.0
        %v899 = vadd.f32 %v875, 1.0
        %v900 = vadd.f32 %v876, 1.0
        %v901 = vadd.f32 %v877, 1.0
        %v902 = vadd.f32 %v878, 1.0
        %v903 = vadd.f32 %v879, 1.0
        %v904 = vmul.f32 %v832, %v880
        %v905 = vmul.f32 %v833, %v881
        %v906 = vmul.f32 %v834, %v882
        %v907 = vmul.f32 %v835, %v883
        %v908 = vmul.f32 %v836, %v884
        %v909 = vmul.f32 %v837, %v885
        %v910 = vmul.f32 %v838, %v886
        %v911 = vmul.f32 %v839, %v887
        %v912 = vmul.f32 %v840, %v888
        %v913 = vmul.f32 %v841, %v889
        %v914 = vmul.f32 %v842, %v890
        %v915 = vmul.f32 %v843, %v891
        %v916 = vmul.f32 %v844, %v892
        %v917 = vmul.f32 %v845, %v893
        %v918 = vmul.f32 %v846, %v894
        %v919 = vmul.f32 %v847, %v895
        %v920 = vmul.f32 %v848, %v896
        %v921 = vmul.f32 %v849, %v897
        %v922 = vmul.f32 %v850, %v898
        %v923 = vmul.f32 %v851, %v899
        %v924 = vmul.f32 %v852, %v900
        %v925 = vmul.f32 %v853, %v901
        %v926 = vmul.f32 %v854, %v902
        %v927 = vmul.f32 %v855, %v903
        %v928 = vpack.c.bf16 %v908, %v904
        %v929 = vpack.c.bf16 %v909, %v905
        %v930 = vpack.c.bf16 %v910, %v906
        %v931 = vpack.c.bf16 %v911, %v907
        %v932 = vpack.c.bf16 %v916, %v912
        %v933 = vpack.c.bf16 %v917, %v913
        %v934 = vpack.c.bf16 %v918, %v914
        %v935 = vpack.c.bf16 %v919, %v915
        %v936 = vpack.c.bf16 %v924, %v920
        %v937 = vpack.c.bf16 %v925, %v921
        %v938 = vpack.c.bf16 %v926, %v922
        %v939 = vpack.c.bf16 %v927, %v923
        %v940 = vld [vmem:[#allocation10] sm:$0xf]
        %v941 = vld [vmem:[#allocation10 + $0x4] sm:$0xf]
        %v942 = vld [vmem:[#allocation10 + $0x8] sm:$0xf]
        %v943 = vld [vmem:[#allocation10 + $0xc] sm:$0xf]
        %v944 = vld [vmem:[#allocation10 + $0x10] sm:$0xf]
        %v945 = vld [vmem:[#allocation10 + $0x14] sm:$0xf]
        %v946 = vld [vmem:[#allocation10 + $0x18] sm:$0xf]
        %v947 = vld [vmem:[#allocation10 + $0x1c] sm:$0xf]
        %v948 = vld [vmem:[#allocation10 + $0x20] sm:$0xf]
        %v949 = vld [vmem:[#allocation10 + $0x24] sm:$0xf]
        %v950 = vld [vmem:[#allocation10 + $0x28] sm:$0xf]
        %v951 = vld [vmem:[#allocation10 + $0x2c] sm:$0xf]
        %v952 = vld [vmem:[#allocation10 + $0x30] sm:$0xf]
        %v953 = vld [vmem:[#allocation10 + $0x34] sm:$0xf]
        %v954 = vld [vmem:[#allocation10 + $0x38] sm:$0xf]
        %v955 = vld [vmem:[#allocation10 + $0x3c] sm:$0xf]
        %v956 = vld [vmem:[#allocation10 + $0x40] sm:$0xf]
        %v957 = vld [vmem:[#allocation10 + $0x44] sm:$0xf]
        %v958 = vld [vmem:[#allocation10 + $0x48] sm:$0xf]
        %v959 = vld [vmem:[#allocation10 + $0x4c] sm:$0xf]
        %v960 = vld [vmem:[#allocation10 + $0x50] sm:$0xf]
        %v961 = vld [vmem:[#allocation10 + $0x54] sm:$0xf]
        %v962 = vld [vmem:[#allocation10 + $0x58] sm:$0xf]
        %v963 = vld [vmem:[#allocation10 + $0x5c] sm:$0xf]
        %v964 = vld [vmem:[#allocation10 + $0x60] sm:$0xf]
        %v965 = vld [vmem:[#allocation10 + $0x64] sm:$0xf]
        %v966 = vld [vmem:[#allocation10 + $0x68] sm:$0xf]
        %v967 = vld [vmem:[#allocation10 + $0x6c] sm:$0xf]
        %v968 = vld [vmem:[#allocation10 + $0x70] sm:$0xf]
        %v969 = vld [vmem:[#allocation10 + $0x74] sm:$0xf]
        %v970 = vld [vmem:[#allocation10 + $0x78] sm:$0xf]
        %v971 = vld [vmem:[#allocation10 + $0x7c] sm:$0xf]
        %v972 = vld [vmem:[#allocation10 + $0x80] sm:$0xf]
        %v973 = vld [vmem:[#allocation10 + $0x84] sm:$0xf]
        %v974 = vld [vmem:[#allocation10 + $0x88] sm:$0xf]
        %v975 = vld [vmem:[#allocation10 + $0x8c] sm:$0xf]
        %v976 = vld [vmem:[#allocation10 + $0x90] sm:$0xf]
        %v977 = vld [vmem:[#allocation10 + $0x94] sm:$0xf]
        %v978 = vld [vmem:[#allocation10 + $0x98] sm:$0xf]
        %v979 = vld [vmem:[#allocation10 + $0x9c] sm:$0xf]
        %v980 = vld [vmem:[#allocation10 + $0xa0] sm:$0xf]
        %v981 = vld [vmem:[#allocation10 + $0xa4] sm:$0xf]
        %v982 = vld [vmem:[#allocation10 + $0xa8] sm:$0xf]
        %v983 = vld [vmem:[#allocation10 + $0xac] sm:$0xf]
        %v984 = vld [vmem:[#allocation10 + $0xb0] sm:$0xf]
        %v985 = vld [vmem:[#allocation10 + $0xb4] sm:$0xf]
        %v986 = vld [vmem:[#allocation10 + $0xb8] sm:$0xf]
        %v987 = vld [vmem:[#allocation10 + $0xbc] sm:$0xf]
        %v988 = vld [vmem:[#allocation10 + $0xc0] sm:$0xf]
        %v989 = vld [vmem:[#allocation10 + $0xc4] sm:$0xf]
        %v990 = vld [vmem:[#allocation10 + $0xc8] sm:$0xf]
        %v991 = vld [vmem:[#allocation10 + $0xcc] sm:$0xf]
        %v992 = vld [vmem:[#allocation10 + $0xd0] sm:$0xf]
        %v993 = vld [vmem:[#allocation10 + $0xd4] sm:$0xf]
        %v994 = vld [vmem:[#allocation10 + $0xd8] sm:$0xf]
        %v995 = vld [vmem:[#allocation10 + $0xdc] sm:$0xf]
        %v996 = vld [vmem:[#allocation10 + $0xe0] sm:$0xf]
        %v997 = vld [vmem:[#allocation10 + $0xe4] sm:$0xf]
        %v998 = vld [vmem:[#allocation10 + $0xe8] sm:$0xf]
        %v999 = vld [vmem:[#allocation10 + $0xec] sm:$0xf]
        %v1000 = vld [vmem:[#allocation10 + $0xf0] sm:$0xf]
        %v1001 = vld [vmem:[#allocation10 + $0xf4] sm:$0xf]
        %v1002 = vld [vmem:[#allocation10 + $0xf8] sm:$0xf]
        %v1003 = vld [vmem:[#allocation10 + $0xfc] sm:$0xf]
        %v1004 = vld [vmem:[%s6] sm:$0x1]
        %v1006 = vperm.slane %v1004, 0
        %v1072 = vunpack.c.l.b16 %v940
        %v1073 = vunpack.c.l.b16 %v941
        %v1074 = vunpack.c.l.b16 %v942
        %v1075 = vunpack.c.l.b16 %v943
        %v1076 = vunpack.c.l.b16 %v944
        %v1077 = vunpack.c.l.b16 %v945
        %v1078 = vunpack.c.l.b16 %v946
        %v1079 = vunpack.c.l.b16 %v947
        %v1080 = vunpack.c.l.b16 %v948
        %v1081 = vunpack.c.l.b16 %v949
        %v1082 = vunpack.c.l.b16 %v950
        %v1083 = vunpack.c.l.b16 %v951
        %v1084 = vunpack.c.l.b16 %v952
        %v1085 = vunpack.c.l.b16 %v953
        %v1086 = vunpack.c.l.b16 %v954
        %v1087 = vunpack.c.l.b16 %v955
        %v1088 = vunpack.c.l.b16 %v956
        %v1089 = vunpack.c.l.b16 %v957
        %v1090 = vunpack.c.l.b16 %v958
        %v1091 = vunpack.c.l.b16 %v959
        %v1092 = vunpack.c.l.b16 %v960
        %v1093 = vunpack.c.l.b16 %v961
        %v1094 = vunpack.c.l.b16 %v962
        %v1095 = vunpack.c.l.b16 %v963
        %v1096 = vunpack.c.l.b16 %v964
        %v1097 = vunpack.c.l.b16 %v965
        %v1098 = vunpack.c.l.b16 %v966
        %v1099 = vunpack.c.l.b16 %v967
        %v1100 = vunpack.c.l.b16 %v968
        %v1101 = vunpack.c.l.b16 %v969
        %v1102 = vunpack.c.l.b16 %v970
        %v1103 = vunpack.c.l.b16 %v971
        %v1104 = vunpack.c.l.b16 %v972
        %v1105 = vunpack.c.l.b16 %v973
        %v1106 = vunpack.c.l.b16 %v974
        %v1107 = vunpack.c.l.b16 %v975
        %v1108 = vunpack.c.l.b16 %v976
        %v1109 = vunpack.c.l.b16 %v977
        %v1110 = vunpack.c.l.b16 %v978
        %v1111 = vunpack.c.l.b16 %v979
        %v1112 = vunpack.c.l.b16 %v980
        %v1113 = vunpack.c.l.b16 %v981
        %v1114 = vunpack.c.l.b16 %v982
        %v1115 = vunpack.c.l.b16 %v983
        %v1116 = vunpack.c.l.b16 %v984
        %v1117 = vunpack.c.l.b16 %v985
        %v1118 = vunpack.c.l.b16 %v986
        %v1119 = vunpack.c.l.b16 %v987
        %v1120 = vunpack.c.l.b16 %v988
        %v1121 = vunpack.c.l.b16 %v989
        %v1122 = vunpack.c.l.b16 %v990
        %v1123 = vunpack.c.l.b16 %v991
        %v1124 = vunpack.c.l.b16 %v992
        %v1125 = vunpack.c.l.b16 %v993
        %v1126 = vunpack.c.l.b16 %v994
        %v1127 = vunpack.c.l.b16 %v995
        %v1128 = vunpack.c.l.b16 %v996
        %v1129 = vunpack.c.l.b16 %v997
        %v1130 = vunpack.c.l.b16 %v998
        %v1131 = vunpack.c.l.b16 %v999
        %v1132 = vunpack.c.l.b16 %v1000
        %v1133 = vunpack.c.l.b16 %v1001
        %v1134 = vunpack.c.l.b16 %v1002
        %v1135 = vunpack.c.l.b16 %v1003
        %v1136 = vpack.c.b16 %v1073, %v1072
        %v1137 = vpack.c.b16 %v1075, %v1074
        %v1138 = vpack.c.b16 %v1077, %v1076
        %v1139 = vpack.c.b16 %v1079, %v1078
        %v1140 = vpack.c.b16 %v1081, %v1080
        %v1141 = vpack.c.b16 %v1083, %v1082
        %v1142 = vpack.c.b16 %v1085, %v1084
        %v1143 = vpack.c.b16 %v1087, %v1086
        %v1144 = vpack.c.b16 %v1089, %v1088
        %v1145 = vpack.c.b16 %v1091, %v1090
        %v1146 = vpack.c.b16 %v1093, %v1092
        %v1147 = vpack.c.b16 %v1095, %v1094
        %v1148 = vpack.c.b16 %v1097, %v1096
        %v1149 = vpack.c.b16 %v1099, %v1098
        %v1150 = vpack.c.b16 %v1101, %v1100
        %v1151 = vpack.c.b16 %v1103, %v1102
        %v1152 = vpack.c.b16 %v1105, %v1104
        %v1153 = vpack.c.b16 %v1107, %v1106
        %v1154 = vpack.c.b16 %v1109, %v1108
        %v1155 = vpack.c.b16 %v1111, %v1110
        %v1156 = vpack.c.b16 %v1113, %v1112
        %v1157 = vpack.c.b16 %v1115, %v1114
        %v1158 = vpack.c.b16 %v1117, %v1116
        %v1159 = vpack.c.b16 %v1119, %v1118
        %v1160 = vpack.c.b16 %v1121, %v1120
        %v1161 = vpack.c.b16 %v1123, %v1122
        %v1162 = vpack.c.b16 %v1125, %v1124
        %v1163 = vpack.c.b16 %v1127, %v1126
        %v1164 = vpack.c.b16 %v1129, %v1128
        %v1165 = vpack.c.b16 %v1131, %v1130
        %v1166 = vpack.c.b16 %v1133, %v1132
        %v1167 = vpack.c.b16 %v1135, %v1134
        %1200 = vmatpush.bf16.msra.mxu0 %v1143
        %1201 = vmatpush.bf16.msra.mxu0 %v1142
        %1202 = vmatpush.bf16.msra.mxu0 %v1141
        %1203 = vmatpush.bf16.msra.mxu0 %v1140
        %1204 = vmatpush.bf16.msra.mxu0 %v1139
        %1205 = vmatpush.bf16.msra.mxu0 %v1138
        %1206 = vmatpush.bf16.msra.mxu0 %v1137
        %1207 = vmatpush.bf16.msra.mxu0 %v1136
        %1208 = vmatmul.bf16.gmra.mxu0 %v928
        %v1209 = vpop.f32.mrf.mxu0
        %v1210 = vadd.f32 %v1006, %v1209
        %v1211 = vpop.f32.mrf.mxu0
        %v1212 = vadd.f32 %v1006, %v1211
        %1213 = vmatmul.bf16.gmra.mxu0 %v932
        %v1214 = vpop.f32.mrf.mxu0
        %v1215 = vadd.f32 %v1006, %v1214
        %v1216 = vpop.f32.mrf.mxu0
        %v1217 = vadd.f32 %v1006, %v1216
        %1218 = vmatmul.bf16.gmra.mxu0 %v936
        %v1219 = vpop.f32.mrf.mxu0
        %v1220 = vadd.f32 %v1006, %v1219
        %v1221 = vpop.f32.mrf.mxu0
        %v1222 = vadd.f32 %v1006, %v1221
        %1223 = vdwg.mxu0
        %1224 = vmatpush.bf16.msra.mxu0 %v1151
        %1225 = vmatpush.bf16.msra.mxu0 %v1150
        %1226 = vmatpush.bf16.msra.mxu0 %v1149
        %1227 = vmatpush.bf16.msra.mxu0 %v1148
        %1228 = vmatpush.bf16.msra.mxu0 %v1147
        %1229 = vmatpush.bf16.msra.mxu0 %v1146
        %1230 = vmatpush.bf16.msra.mxu0 %v1145
        %1231 = vmatpush.bf16.msra.mxu0 %v1144
        %1232 = vmatmul.bf16.gmra.mxu0 %v929
        %v1233 = vpop.f32.mrf.mxu0
        %v1234 = vadd.f32 %v1210, %v1233
        %v1235 = vpop.f32.mrf.mxu0
        %v1236 = vadd.f32 %v1212, %v1235
        %1237 = vmatmul.bf16.gmra.mxu0 %v933
        %v1238 = vpop.f32.mrf.mxu0
        %v1239 = vadd.f32 %v1215, %v1238
        %v1240 = vpop.f32.mrf.mxu0
        %v1241 = vadd.f32 %v1217, %v1240
        %1242 = vmatmul.bf16.gmra.mxu0 %v937
        %v1243 = vpop.f32.mrf.mxu0
        %v1244 = vadd.f32 %v1220, %v1243
        %v1245 = vpop.f32.mrf.mxu0
        %v1246 = vadd.f32 %v1222, %v1245
        %1247 = vdwg.mxu0
        %1248 = vmatpush.bf16.msra.mxu0 %v1159
        %1249 = vmatpush.bf16.msra.mxu0 %v1158
        %1250 = vmatpush.bf16.msra.mxu0 %v1157
        %1251 = vmatpush.bf16.msra.mxu0 %v1156
        %1252 = vmatpush.bf16.msra.mxu0 %v1155
        %1253 = vmatpush.bf16.msra.mxu0 %v1154
        %1254 = vmatpush.bf16.msra.mxu0 %v1153
        %1255 = vmatpush.bf16.msra.mxu0 %v1152
        %1256 = vmatmul.bf16.gmra.mxu0 %v930
        %v1257 = vpop.f32.mrf.mxu0
        %v1258 = vadd.f32 %v1234, %v1257
        %v1259 = vpop.f32.mrf.mxu0
        %v1260 = vadd.f32 %v1236, %v1259
        %1261 = vmatmul.bf16.gmra.mxu0 %v934
        %v1262 = vpop.f32.mrf.mxu0
        %v1263 = vadd.f32 %v1239, %v1262
        %v1264 = vpop.f32.mrf.mxu0
        %v1265 = vadd.f32 %v1241, %v1264
        %1266 = vmatmul.bf16.gmra.mxu0 %v938
        %v1267 = vpop.f32.mrf.mxu0
        %v1268 = vadd.f32 %v1244, %v1267
        %v1269 = vpop.f32.mrf.mxu0
        %v1270 = vadd.f32 %v1246, %v1269
        %1271 = vdwg.mxu0
        %1272 = vmatpush.bf16.msra.mxu0 %v1167
        %1273 = vmatpush.bf16.msra.mxu0 %v1166
        %1274 = vmatpush.bf16.msra.mxu0 %v1165
        %1275 = vmatpush.bf16.msra.mxu0 %v1164
        %1276 = vmatpush.bf16.msra.mxu0 %v1163
        %1277 = vmatpush.bf16.msra.mxu0 %v1162
        %1278 = vmatpush.bf16.msra.mxu0 %v1161
        %1279 = vmatpush.bf16.msra.mxu0 %v1160
        %1280 = vmatmul.bf16.gmra.mxu0 %v931
        %v1281 = vpop.f32.mrf.mxu0
        %v1282 = vadd.f32 %v1258, %v1281
        %v1283 = vpop.f32.mrf.mxu0
        %v1284 = vadd.f32 %v1260, %v1283
        %1285 = vmatmul.bf16.gmra.mxu0 %v935
        %v1286 = vpop.f32.mrf.mxu0
        %v1287 = vadd.f32 %v1263, %v1286
        %v1288 = vpop.f32.mrf.mxu0
        %v1289 = vadd.f32 %v1265, %v1288
        %1290 = vmatmul.bf16.gmra.mxu0 %v939
        %v1291 = vpop.f32.mrf.mxu0
        %v1292 = vadd.f32 %v1268, %v1291
        %v1293 = vpop.f32.mrf.mxu0
        %v1294 = vadd.f32 %v1270, %v1293
        %1295 = vdwg.mxu0
        %1296 = vst [vmem:[%s367] sm:$0xff] %v1282
        %1297 = vst [vmem:[%s367 + $0x8] sm:$0xff] %v1284
        %1298 = vst [vmem:[%s367 + $0x10] sm:$0xff] %v1287
        %1299 = vst [vmem:[%s367 + $0x18] sm:$0xff] %v1289
        %1300 = vst [vmem:[%s367 + $0x20] sm:$0xff] %v1292
        %1301 = vst [vmem:[%s367 + $0x28] sm:$0xff] %v1294
        %s1302 = sand.u32 %s186, 1
        %s1303 = scalar_lea.sflag [#allocation4], %s1302
        %s1304 = sand.u32 %s186, 1
        %s1305 = smul.addr %s1304, 48
        %s1306 = scalar_lea.vmem [#allocation11], %s1305
        // Predicated region
        $region69: #{tpu_custom_call.1} parent=47 // pred_check
          %p1307 = pneg %p196
        $region70: #{tpu_custom_call.1} parent=47 // pred_check_branch
          %1309 = sbr.rel (%p1307) target = $region72
        $region71: #{tpu_custom_call.1} parent=47 // pred_region
          %s1310 = smul.u32 6, %s26
          %s1311 = ssub.s32 11, %s1310
          %p1312 = scmp.lt.s32.totalorder %s1311, 6
          %s1313 = scalar_select %p1312, %s1311, 6
          %s1314 = smul.u32 8, %s1313
          %s1315 = ssub.s32 48, %s1314
          %s1316 = sshll.u32 %s1315, 4
          %1317 = vsyncadd %s1303, %s1316
          %p1318 = scmp.ne.s32.totalorder 0, %s1314
          %s1319 = smul.addr %s1310, 8
          %s1320 = scalar_lea.hbm %s7, %s1319
          %s1321 = smul.u32 8, %s1313
          %s1322 = sshll.u32 %s1306, 4
          %s1323 = int_to_ptr.vmem [resolvable:$true] %s1322
          %s1324 = sshll.u32 %s1320, 4
          %s1325 = int_to_ptr.hbm [resolvable:$true] %s1324
          %s1326 = sshll.u32 %s1321, 4
          %1330 = dma.vmem_to_hbm [thread:$0]  (%p1318), %s1323, %s1326, %s1325, %s1303, 128, 128, 8
        $region72: #{tpu_custom_call.1} parent=47 // pred_fallthru
          _
      $region48: #{tpu_custom_call.1} parent=5 // pred_fallthru
        _
      %p1331 = scmp.le.s32.totalorder 2, %s21
      // Predicated region
      $region73: #{tpu_custom_call.1} parent=5 // pred_check
        %p1332 = pneg %p1331
      $region74: #{tpu_custom_call.1} parent=5 // pred_check_branch
        %1334 = sbr.rel (%p1332) target = $region76
      $region75: #{tpu_custom_call.1} parent=5 // pred_region
        %s1335 = ssub.s32 %s21, 2
        // Predicated region
        $region77: #{tpu_custom_call.1} parent=75 // pred_check
          %p1336 = pneg %p202
        $region78: #{tpu_custom_call.1} parent=75 // pred_check_branch
          %1338 = sbr.rel (%p1336) target = $region80
        $region79: #{tpu_custom_call.1} parent=75 // pred_region
          %s1339 = sand.u32 %s187, 1
          %s1340 = scalar_lea.sflag [#allocation4], %s1339
          %s1341 = sand.u32 %s187, 1
          %s1342 = smul.addr %s1341, 48
          %s1343 = scalar_lea.vmem [#allocation11], %s1342
          %1345 = dma.done %s1340, 768
        $region80: #{tpu_custom_call.1} parent=75 // pred_fallthru
          _
      $region76: #{tpu_custom_call.1} parent=5 // pred_fallthru
        _
    $region6: #{tpu_custom_call.1} parent=1 // loop_footer
      %s25 = sadd.s32 1, %s21
    $region7: #{tpu_custom_call.1} parent=1 // loop_footer_branch
      %20 = sbr.rel target = $region3
    $region8: #{tpu_custom_call.1} parent=1 // loop_exit
      _
    %1346 = vsyncpa [#allocation3], 1
    %s1347 = scalar_lea.sflag [#allocation3], 1
    %1348 = vsyncpa %s1347, 1
    %1349 = vsyncpa [#allocation6], 1
    %1350 = vsyncpa [#allocation9], 1
    %1351 = vsyncpa [#allocation4], 1
    %s1352 = scalar_lea.sflag [#allocation4], 1
    %1353 = vsyncpa %s1352, 1

// kernel: tpu_custom_call.1
$region0: #{tpu_custom_call.1}
  #allocation0 [shape = 'u32[]', space=smem, size = 0x4, offset = 0x4, fixed_abs, tag = 'smem constant byte address 0x4 - core index']
  #allocation1 [shape = 'u32[72,128]{1,0:T(1,128)}', space=vmem, size = 0x9000, scoped, tag = 'internal scratch']
  %s0 = inlined_call_operand.hbm [shape: f32[88,128], index: 0, kind: input, shape index: {}]
  %s1 = inlined_call_operand.hbm [shape: f32[1,128], index: 1, kind: input, shape index: {}]
  %s2 = inlined_call_operand.vmem [shape: f32[1,128], index: 2, kind: input, shape index: {}]
  %s3 = inlined_call_operand.hbm [shape: bf16[128,512], index: 3, kind: input, shape index: {}]
  %s4 = inlined_call_operand.hbm [shape: f32[1,512], index: 4, kind: input, shape index: {}]
  %s5 = inlined_call_operand.hbm [shape: bf16[512,128], index: 5, kind: input, shape index: {}]
  %s6 = inlined_call_operand.vmem [shape: f32[1,128], index: 6, kind: input, shape index: {}]
  %s7 = inlined_call_operand.hbm [shape: f32[88,128], index: 7, kind: output, shape index: {}]
  %s8 = sld [smem:[#allocation0]]
  $region81: #{tpu_custom_call.1} parent=0
    _
  %s10 = ssub.s32 1, %s8
  %s11 = scalar_select 0, %s10, %s8
  $region1: #{tpu_custom_call.1} parent=0
    #allocation2 [shape = 'u8[49152]{0}', space=vmem, size = 0xc000, scoped, tag = 'input window, operand 0']
    #allocation3 [shape = 's32[2]{0}', space=sflag, size = 0x8, scoped, tag = 'scoped memory for tpu_custom_call.1']
    #allocation4 [shape = 's32[2]{0}', space=sflag, size = 0x8, scoped, tag = 'scoped memory for tpu_custom_call.1']
    #allocation5 [shape = 'u8[512]{0}', space=vmem, size = 0x400, scoped, tag = 'input window, operand 1, single buffered']
    #allocation6 [shape = 's32[1]{0}', space=sflag, size = 0x4, scoped, tag = 'scoped memory for tpu_custom_call.1']
    #allocation7 [shape = 'u8[131072]{0}', space=vmem, size = 0x20000, scoped, tag = 'input window, operand 3, single buffered']
    #allocation8 [shape = 'u8[2048]{0}', space=vmem, size = 0x800, scoped, tag = 'input window, operand 4, single buffered']
    #allocation9 [shape = 's32[1]{0}', space=sflag, size = 0x4, scoped, tag = 'scoped memory for tpu_custom_call.1']
    #allocation10 [shape = 'u8[131072]{0}', space=vmem, size = 0x20000, scoped, tag = 'input window, operand 5, single buffered']
    #allocation11 [shape = 'u8[49152]{0}', space=vmem, size = 0xc000, scoped, tag = 'output window, operand 0']
    %12 = vsyncpa [#allocation3], 0
    %s13 = scalar_lea.sflag [#allocation3], 1
    %14 = vsyncpa %s13, 0
    %15 = vsyncpa [#allocation6], 0
    %16 = vsyncpa [#allocation9], 0
    %17 = vsyncpa [#allocation4], 0
    %s18 = scalar_lea.sflag [#allocation4], 1
    %19 = vsyncpa %s18, 0
    loop: start=0, step=1, limit=4
    $region2: #{tpu_custom_call.1} parent=1 // loop_pre_header
      _
    $region3: #{tpu_custom_call.1} parent=1 // loop_header
      %s21 = sphi 0, %s25
      %p22 = scmp.ge.s32.totalorder %s21, 4
      %s31 = sphi 0, %s33
      %s34 = sphi 0, %s31
      %s35 = sphi 0, %s34
      %s51 = sphi 0, %s35
      %s55 = sphi 0, %s55
      %s57 = sphi 0, %s55
      %s58 = sphi 0, %s57
      %s72 = sphi 0, %s58
      %s76 = sphi 0, %s76
      %s78 = sphi 0, %s76
      %s79 = sphi 0, %s78
      %s93 = sphi 0, %s79
      %s97 = sphi 0, %s97
      %s99 = sphi 0, %s97
      %s100 = sphi 0, %s99
      %s114 = sphi 0, %s100
      %s118 = sphi 0, %s118
      %s120 = sphi 0, %s118
      %s121 = sphi 0, %s120
      %s135 = sphi 0, %s121
      %s139 = sphi 0, %s139
      %s141 = sphi 0, %s139
      %s142 = sphi 0, %s141
      %s156 = sphi 0, %s142
      %s160 = sphi 0, %s160
      %s162 = sphi 0, %s160
      %s163 = sphi 0, %s162
      %s177 = sphi 0, %s163
      %s183 = sphi 0, %s185
      %s186 = sphi 0, %s183
      %s187 = sphi 0, %s186
      %s203 = sphi 0, %s187
    $region4: #{tpu_custom_call.1} parent=1 // loop_header_branch
      %24 = sbr.rel (%p22) target = $region8
    $region5: #{tpu_custom_call.1} parent=1 // loop_body
      %s26 = ssub.s32 %s21, 1
      %s27 = ssub.s32 %s21, 2
      %s28 = sadd.s32 %s21, 1
      %s29 = ssub.s32 %s21, %s28
      %p30 = scmp.eq.s32.totalorder %s29, 0
      %s32 = sadd.s32 %s31, 1
      %s33 = scalar_select %p30, %s31, %s32
      %p36 = pneg %p30
      %p37 = scmp.eq.s32.totalorder %s21, 1
      %p38 = por %p36, %p37
      %p39 = scmp.ne.s32.totalorder %s31, %s34
      %p40 = scmp.eq.s32.totalorder %s21, 0
      %p41 = por %p39, %p40
      %p42 = scmp.ne.s32.totalorder %s31, %s34
      %p43 = scmp.eq.s32.totalorder %s26, 1
      %p44 = por %p42, %p43
      %p45 = scmp.ne.s32.totalorder %s34, %s35
      %p46 = scmp.eq.s32.totalorder %s26, 0
      %p47 = por %p45, %p46
      %p48 = scmp.ne.s32.totalorder %s34, %s35
      %p49 = scmp.eq.s32.totalorder %s27, 1
      %p50 = por %p48, %p49
      %p52 = scmp.ne.s32.totalorder %s35, %s51
      %p53 = scmp.eq.s32.totalorder %s27, 0
      %p54 = por %p52, %p53
      %s56 = sadd.s32 %s55, 1
      %p59 = scmp.eq.s32.totalorder %s21, 1
      %p60 = scmp.ne.s32.totalorder %s55, %s57
      %p61 = scmp.eq.s32.totalorder %s21, 0
      %p62 = por %p60, %p61
      %p63 = scmp.ne.s32.totalorder %s55, %s57
      %p64 = scmp.eq.s32.totalorder %s26, 1
      %p65 = por %p63, %p64
      %p66 = scmp.ne.s32.totalorder %s57, %s58
      %p67 = scmp.eq.s32.totalorder %s26, 0
      %p68 = por %p66, %p67
      %p69 = scmp.ne.s32.totalorder %s57, %s58
      %p70 = scmp.eq.s32.totalorder %s27, 1
      %p71 = por %p69, %p70
      %p73 = scmp.ne.s32.totalorder %s58, %s72
      %p74 = scmp.eq.s32.totalorder %s27, 0
      %p75 = por %p73, %p74
      %s77 = sadd.s32 %s76, 1
      %p80 = scmp.eq.s32.totalorder %s21, 1
      %p81 = scmp.ne.s32.totalorder %s76, %s78
      %p82 = scmp.eq.s32.totalorder %s21, 0
      %p83 = por %p81, %p82
      %p84 = scmp.ne.s32.totalorder %s76, %s78
      %p85 = scmp.eq.s32.totalorder %s26, 1
      %p86 = por %p84, %p85
      %p87 = scmp.ne.s32.totalorder %s78, %s79
      %p88 = scmp.eq.s32.totalorder %s26, 0
      %p89 = por %p87, %p88
      %p90 = scmp.ne.s32.totalorder %s78, %s79
      %p91 = scmp.eq.s32.totalorder %s27, 1
      %p92 = por %p90, %p91
      %p94 = scmp.ne.s32.totalorder %s79, %s93
      %p95 = scmp.eq.s32.totalorder %s27, 0
      %p96 = por %p94, %p95
      %s98 = sadd.s32 %s97, 1
      %p101 = scmp.eq.s32.totalorder %s21, 1
      %p102 = scmp.ne.s32.totalorder %s97, %s99
      %p103 = scmp.eq.s32.totalorder %s21, 0
      %p104 = por %p102, %p103
      %p105 = scmp.ne.s32.totalorder %s97, %s99
      %p106 = scmp.eq.s32.totalorder %s26, 1
      %p107 = por %p105, %p106
      %p108 = scmp.ne.s32.totalorder %s99, %s100
      %p109 = scmp.eq.s32.totalorder %s26, 0
      %p110 = por %p108, %p109
      %p111 = scmp.ne.s32.totalorder %s99, %s100
      %p112 = scmp.eq.s32.totalorder %s27, 1
      %p113 = por %p111, %p112
      %p115 = scmp.ne.s32.totalorder %s100, %s114
      %p116 = scmp.eq.s32.totalorder %s27, 0
      %p117 = por %p115, %p116
      %s119 = sadd.s32 %s118, 1
      %p122 = scmp.eq.s32.totalorder %s21, 1
      %p123 = scmp.ne.s32.totalorder %s118, %s120
      %p124 = scmp.eq.s32.totalorder %s21, 0
      %p125 = por %p123, %p124
      %p126 = scmp.ne.s32.totalorder %s118, %s120
      %p127 = scmp.eq.s32.totalorder %s26, 1
      %p128 = por %p126, %p127
      %p129 = scmp.ne.s32.totalorder %s120, %s121
      %p130 = scmp.eq.s32.totalorder %s26, 0
      %p131 = por %p129, %p130
      %p132 = scmp.ne.s32.totalorder %s120, %s121
      %p133 = scmp.eq.s32.totalorder %s27, 1
      %p134 = por %p132, %p133
      %p136 = scmp.ne.s32.totalorder %s121, %s135
      %p137 = scmp.eq.s32.totalorder %s27, 0
      %p138 = por %p136, %p137
      %s140 = sadd.s32 %s139, 1
      %p143 = scmp.eq.s32.totalorder %s21, 1
      %p144 = scmp.ne.s32.totalorder %s139, %s141
      %p145 = scmp.eq.s32.totalorder %s21, 0
      %p146 = por %p144, %p145
      %p147 = scmp.ne.s32.totalorder %s139, %s141
      %p148 = scmp.eq.s32.totalorder %s26, 1
      %p149 = por %p147, %p148
      %p150 = scmp.ne.s32.totalorder %s141, %s142
      %p151 = scmp.eq.s32.totalorder %s26, 0
      %p152 = por %p150, %p151
      %p153 = scmp.ne.s32.totalorder %s141, %s142
      %p154 = scmp.eq.s32.totalorder %s27, 1
      %p155 = por %p153, %p154
      %p157 = scmp.ne.s32.totalorder %s142, %s156
      %p158 = scmp.eq.s32.totalorder %s27, 0
      %p159 = por %p157, %p158
      %s161 = sadd.s32 %s160, 1
      %p164 = scmp.eq.s32.totalorder %s21, 1
      %p165 = scmp.ne.s32.totalorder %s160, %s162
      %p166 = scmp.eq.s32.totalorder %s21, 0
      %p167 = por %p165, %p166
      %p168 = scmp.ne.s32.totalorder %s160, %s162
      %p169 = scmp.eq.s32.totalorder %s26, 1
      %p170 = por %p168, %p169
      %p171 = scmp.ne.s32.totalorder %s162, %s163
      %p172 = scmp.eq.s32.totalorder %s26, 0
      %p173 = por %p171, %p172
      %p174 = scmp.ne.s32.totalorder %s162, %s163
      %p175 = scmp.eq.s32.totalorder %s27, 1
      %p176 = por %p174, %p175
      %p178 = scmp.ne.s32.totalorder %s163, %s177
      %p179 = scmp.eq.s32.totalorder %s27, 0
      %p180 = por %p178, %p179
      %s181 = ssub.s32 %s21, %s28
      %p182 = scmp.eq.s32.totalorder %s181, 0
      %s184 = sadd.s32 %s183, 1
      %s185 = scalar_select %p182, %s183, %s184
      %p188 = pneg %p182
      %p189 = scmp.eq.s32.totalorder %s21, 1
      %p190 = por %p188, %p189
      %p191 = scmp.ne.s32.totalorder %s183, %s186
      %p192 = scmp.eq.s32.totalorder %s21, 0
      %p193 = por %p191, %p192
      %p194 = scmp.ne.s32.totalorder %s183, %s186
      %p195 = scmp.eq.s32.totalorder %s26, 1
      %p196 = por %p194, %p195
      %p197 = scmp.ne.s32.totalorder %s186, %s187
      %p198 = scmp.eq.s32.totalorder %s26, 0
      %p199 = por %p197, %p198
      %p200 = scmp.ne.s32.totalorder %s186, %s187
      %p201 = scmp.eq.s32.totalorder %s27, 1
      %p202 = por %p200, %p201
      %p204 = scmp.ne.s32.totalorder %s187, %s203
      %p205 = scmp.eq.s32.totalorder %s27, 0
      %p206 = por %p204, %p205
      %p207 = scmp.le.s32.totalorder 1, %s21
      %p208 = scmp.lt.s32.totalorder %s21, 3
      %p209 = pnand %p207, %p208
      %p210 = pneg %p209
      // Predicated region
      $region9: #{tpu_custom_call.1} parent=5 // pred_check
        _
      $region10: #{tpu_custom_call.1} parent=5 // pred_check_branch
        %212 = sbr.rel (%p209) target = $region12
      $region11: #{tpu_custom_call.1} parent=5 // pred_region
        %s213 = ssub.s32 %s21, 1
        // Predicated region
        $region13: #{tpu_custom_call.1} parent=11 // pred_check
          %p214 = pneg %p68
        $region14: #{tpu_custom_call.1} parent=11 // pred_check_branch
          %216 = sbr.rel (%p214) target = $region16
        $region15: #{tpu_custom_call.1} parent=11 // pred_region
          %218 = vsyncadd [#allocation6], 0
          %s220 = sshll.u32 %s1, 4
          %s221 = int_to_ptr.hbm [resolvable:$true] %s220
          %s222 = sshll.u32 [#allocation5], 4
          %s223 = int_to_ptr.vmem [resolvable:$true] %s222
          %225 = dma.hbm_to_vmem [thread:$0]  %s221, 16, %s223, [#allocation6]
        $region16: #{tpu_custom_call.1} parent=11 // pred_fallthru
          _
        // Predicated region
        $region17: #{tpu_custom_call.1} parent=11 // pred_check
          %p226 = pneg %p89
        $region18: #{tpu_custom_call.1} parent=11 // pred_check_branch
          %228 = sbr.rel (%p226) target = $region20
        $region19: #{tpu_custom_call.1} parent=11 // pred_region
          _
        $region20: #{tpu_custom_call.1} parent=11 // pred_fallthru
          _
        // Predicated region
        $region21: #{tpu_custom_call.1} parent=11 // pred_check
          %p229 = pneg %p110
        $region22: #{tpu_custom_call.1} parent=11 // pred_check_branch
          %231 = sbr.rel (%p229) target = $region24
        $region23: #{tpu_custom_call.1} parent=11 // pred_region
          %233 = vsyncadd [#allocation6], 0
          %s234 = sshll.u32 %s3, 4
          %s235 = int_to_ptr.hbm [resolvable:$true] %s234
          %s236 = sshll.u32 [#allocation7], 4
          %s237 = int_to_ptr.vmem [resolvable:$true] %s236
          %242 = dma.hbm_to_vmem [thread:$0]  %s235, 4096, %s237, [#allocation6], 256, 256, 16
        $region24: #{tpu_custom_call.1} parent=11 // pred_fallthru
          _
        // Predicated region
        $region25: #{tpu_custom_call.1} parent=11 // pred_check
          %p243 = pneg %p131
        $region26: #{tpu_custom_call.1} parent=11 // pred_check_branch
          %245 = sbr.rel (%p243) target = $region28
        $region27: #{tpu_custom_call.1} parent=11 // pred_region
          %247 = vsyncadd [#allocation9], 0
          %s249 = sshll.u32 %s4, 4
          %s250 = int_to_ptr.hbm [resolvable:$true] %s249
          %s251 = sshll.u32 [#allocation8], 4
          %s252 = int_to_ptr.vmem [resolvable:$true] %s251
          %254 = dma.hbm_to_vmem [thread:$0]  %s250, 64, %s252, [#allocation9]
        $region28: #{tpu_custom_call.1} parent=11 // pred_fallthru
          _
        // Predicated region
        $region29: #{tpu_custom_call.1} parent=11 // pred_check
          %p255 = pneg %p152
        $region30: #{tpu_custom_call.1} parent=11 // pred_check_branch
          %257 = sbr.rel (%p255) target = $region32
        $region31: #{tpu_custom_call.1} parent=11 // pred_region
          %259 = vsyncadd [#allocation9], 0
          %s260 = sshll.u32 %s5, 4
          %s261 = int_to_ptr.hbm [resolvable:$true] %s260
          %s262 = sshll.u32 [#allocation10], 4
          %s263 = int_to_ptr.vmem [resolvable:$true] %s262
          %268 = dma.hbm_to_vmem [thread:$0]  %s261, 4096, %s263, [#allocation9], 64, 64, 4
        $region32: #{tpu_custom_call.1} parent=11 // pred_fallthru
          _
        // Predicated region
        $region33: #{tpu_custom_call.1} parent=11 // pred_check
          %p269 = pneg %p173
        $region34: #{tpu_custom_call.1} parent=11 // pred_check_branch
          %271 = sbr.rel (%p269) target = $region36
        $region35: #{tpu_custom_call.1} parent=11 // pred_region
          _
        $region36: #{tpu_custom_call.1} parent=11 // pred_fallthru
          _
      $region12: #{tpu_custom_call.1} parent=5 // pred_fallthru
        _
      %p272 = scmp.lt.s32.totalorder %s21, 2
      // Predicated region
      $region37: #{tpu_custom_call.1} parent=5 // pred_check
        %p273 = pneg %p272
      $region38: #{tpu_custom_call.1} parent=5 // pred_check_branch
        %275 = sbr.rel (%p273) target = $region40
      $region39: #{tpu_custom_call.1} parent=5 // pred_region
        // Predicated region
        $region41: #{tpu_custom_call.1} parent=39 // pred_check
          %p276 = pneg %p41
        $region42: #{tpu_custom_call.1} parent=39 // pred_check_branch
          %278 = sbr.rel (%p276) target = $region44
        $region43: #{tpu_custom_call.1} parent=39 // pred_region
          %s279 = sand.u32 %s31, 1
          %s280 = scalar_lea.sflag [#allocation3], %s279
          %s281 = sand.u32 %s31, 1
          %s282 = smul.addr %s281, 48
          %s283 = scalar_lea.vmem [#allocation2], %s282
          %s284 = smul.u32 6, %s21
          %s285 = ssub.s32 11, %s284
          %p286 = scmp.lt.s32.totalorder %s285, 6
          %s287 = scalar_select %p286, %s285, 6
          %s288 = smul.u32 8, %s287
          %s289 = ssub.s32 48, %s288
          %s290 = sshll.u32 %s289, 4
          %291 = vsyncadd %s280, %s290
          %p292 = scmp.ne.s32.totalorder 0, %s288
          %s293 = smul.addr %s284, 8
          %s294 = scalar_lea.hbm %s0, %s293
          %s295 = smul.u32 8, %s287
          %s296 = sshll.u32 %s294, 4
          %s297 = int_to_ptr.hbm [resolvable:$true] %s296
          %s298 = sshll.u32 %s283, 4
          %s299 = int_to_ptr.vmem [resolvable:$true] %s298
          %s300 = sshll.u32 %s295, 4
          %304 = dma.hbm_to_vmem [thread:$0]  (%p292), %s297, %s300, %s299, %s280, 128, 128, 8
        $region44: #{tpu_custom_call.1} parent=39 // pred_fallthru
          _
      $region40: #{tpu_custom_call.1} parent=5 // pred_fallthru
        _
      %p305 = scmp.le.s32.totalorder 1, %s21
      %p306 = scmp.lt.s32.totalorder %s21, 3
      %p307 = pnand %p305, %p306
      %p308 = pneg %p307
      // Predicated region
      $region45: #{tpu_custom_call.1} parent=5 // pred_check
        _
      $region46: #{tpu_custom_call.1} parent=5 // pred_check_branch
        %310 = sbr.rel (%p307) target = $region48
      $region47: #{tpu_custom_call.1} parent=5 // pred_region
        %s311 = ssub.s32 %s21, 1
        %s312 = sand.u32 %s34, 1
        %s313 = scalar_lea.sflag [#allocation3], %s312
        %s314 = sand.u32 %s34, 1
        %s315 = smul.addr %s314, 48
        %s316 = scalar_lea.vmem [#allocation2], %s315
        // Predicated region
        $region49: #{tpu_custom_call.1} parent=47 // pred_check
          %p317 = pneg %p47
        $region50: #{tpu_custom_call.1} parent=47 // pred_check_branch
          %319 = sbr.rel (%p317) target = $region52
        $region51: #{tpu_custom_call.1} parent=47 // pred_region
          %321 = dma.done %s313, 768
        $region52: #{tpu_custom_call.1} parent=47 // pred_fallthru
          _
        // Predicated region
        $region53: #{tpu_custom_call.1} parent=47 // pred_check
          %p322 = pneg %p68
        $region54: #{tpu_custom_call.1} parent=47 // pred_check_branch
          %324 = sbr.rel (%p322) target = $region56
        $region55: #{tpu_custom_call.1} parent=47 // pred_region
          %326 = dma.done [#allocation6], 16
        $region56: #{tpu_custom_call.1} parent=47 // pred_fallthru
          _
        // Predicated region
        $region57: #{tpu_custom_call.1} parent=47 // pred_check
          %p327 = pneg %p110
        $region58: #{tpu_custom_call.1} parent=47 // pred_check_branch
          %329 = sbr.rel (%p327) target = $region60
        $region59: #{tpu_custom_call.1} parent=47 // pred_region
          %331 = dma.done [#allocation6], 4096
        $region60: #{tpu_custom_call.1} parent=47 // pred_fallthru
          _
        // Predicated region
        $region61: #{tpu_custom_call.1} parent=47 // pred_check
          %p332 = pneg %p131
        $region62: #{tpu_custom_call.1} parent=47 // pred_check_branch
          %334 = sbr.rel (%p332) target = $region64
        $region63: #{tpu_custom_call.1} parent=47 // pred_region
          %336 = dma.done [#allocation9], 64
        $region64: #{tpu_custom_call.1} parent=47 // pred_fallthru
          _
        // Predicated region
        $region65: #{tpu_custom_call.1} parent=47 // pred_check
          %p337 = pneg %p152
        $region66: #{tpu_custom_call.1} parent=47 // pred_check_branch
          %339 = sbr.rel (%p337) target = $region68
        $region67: #{tpu_custom_call.1} parent=47 // pred_region
          %341 = dma.done [#allocation9], 4096
        $region68: #{tpu_custom_call.1} parent=47 // pred_fallthru
          _
        %s342 = sand.u32 %s34, 1
        %s343 = scalar_lea.sflag [#allocation3], %s342
        %s344 = sand.u32 %s34, 1
        %s345 = smul.addr %s344, 48
        %s346 = scalar_lea.vmem [#allocation2], %s345
        %p347 = pneg %p47
        %p348 = pneg %p44
        %p349 = pneg %p68
        %p350 = pneg %p65
        %p351 = pneg %p89
        %p352 = pneg %p86
        %p353 = pneg %p110
        %p354 = pneg %p107
        %p355 = pneg %p131
        %p356 = pneg %p128
        %p357 = pneg %p152
        %p358 = pneg %p149
        %p359 = pneg %p173
        %p360 = pneg %p170
        %p361 = pneg %p199
        %p362 = pneg %p196
        %s363 = sand.u32 %s186, 1
        %s364 = scalar_lea.sflag [#allocation4], %s363
        %s365 = sand.u32 %s186, 1
        %s366 = smul.addr %s365, 48
        %s367 = scalar_lea.vmem [#allocation11], %s366
        %s368 = smul.u32 6, %s26
        %s369 = ssub.s32 11, %s368
        %p370 = scmp.lt.s32.totalorder %s369, 6
        %s371 = scalar_select %p370, %s369, 6
        %s372 = smul.u32 8, %s371
        %s373 = smul.u32 6, %s26
        %s374 = ssub.s32 11, %s373
        %p375 = scmp.lt.s32.totalorder %s374, 6
        %s376 = scalar_select %p375, %s374, 6
        %s377 = smul.u32 8, %s376
        %v378 = vld [vmem:[%s316] sm:$0xff]
        %v379 = vld [vmem:[%s316 + $0x8] sm:$0xff]
        %v380 = vld [vmem:[%s316 + $0x10] sm:$0xff]
        %v381 = vld [vmem:[%s316 + $0x18] sm:$0xff]
        %v382 = vld [vmem:[%s316 + $0x20] sm:$0xff]
        %v383 = vld [vmem:[%s316 + $0x28] sm:$0xff]
        %384 = vadd.xlane.f32.xlu0 %v378
        %v385 = vpop.xlane.xlu0 %384
        %386 = vadd.xlane.f32.xlu0 %v379
        %v387 = vpop.xlane.xlu0 %386
        %388 = vadd.xlane.f32.xlu0 %v380
        %v389 = vpop.xlane.xlu0 %388
        %390 = vadd.xlane.f32.xlu0 %v381
        %v391 = vpop.xlane.xlu0 %390
        %392 = vadd.xlane.f32.xlu0 %v382
        %v393 = vpop.xlane.xlu0 %392
        %394 = vadd.xlane.f32.xlu0 %v383
        %v395 = vpop.xlane.xlu0 %394
        %v396 = vrcp.pop 128.0
        %v397 = vmul.f32 128.0, %v396
        %v398 = vsub.f32 1.0, %v397
        %v399 = vmul.f32 %v396, %v398
        %v400 = vadd.f32 %v396, %v399
        %vm401 = vweird.f32 %v396
        %v402 = vsel %vm401, %v396, %v400
        %v403 = vmul.f32 %v385, %v402
        %v404 = vmul.f32 %v387, %v402
        %v405 = vmul.f32 %v389, %v402
        %v406 = vmul.f32 %v391, %v402
        %v407 = vmul.f32 %v393, %v402
        %v408 = vmul.f32 %v395, %v402
        %v409 = vsub.f32 %v378, %v403
        %v410 = vsub.f32 %v379, %v404
        %v411 = vsub.f32 %v380, %v405
        %v412 = vsub.f32 %v381, %v406
        %v413 = vsub.f32 %v382, %v407
        %v414 = vsub.f32 %v383, %v408
        %v415 = vmul.f32 %v409, %v409
        %v416 = vmul.f32 %v410, %v410
        %v417 = vmul.f32 %v411, %v411
        %v418 = vmul.f32 %v412, %v412
        %v419 = vmul.f32 %v413, %v413
        %v420 = vmul.f32 %v414, %v414
        %421 = vadd.xlane.f32.xlu0 %v415
        %v422 = vpop.xlane.xlu0 %421
        %423 = vadd.xlane.f32.xlu0 %v416
        %v424 = vpop.xlane.xlu0 %423
        %425 = vadd.xlane.f32.xlu0 %v417
        %v426 = vpop.xlane.xlu0 %425
        %427 = vadd.xlane.f32.xlu0 %v418
        %v428 = vpop.xlane.xlu0 %427
        %429 = vadd.xlane.f32.xlu0 %v419
        %v430 = vpop.xlane.xlu0 %429
        %431 = vadd.xlane.f32.xlu0 %v420
        %v432 = vpop.xlane.xlu0 %431
        %v433 = vmul.f32 %v422, %v402
        %v434 = vmul.f32 %v424, %v402
        %v435 = vmul.f32 %v426, %v402
        %v436 = vmul.f32 %v428, %v402
        %v437 = vmul.f32 %v430, %v402
        %v438 = vmul.f32 %v432, %v402
        %v439 = vadd.f32 %v433, 1e-05
        %v440 = vadd.f32 %v434, 1e-05
        %v441 = vadd.f32 %v435, 1e-05
        %v442 = vadd.f32 %v436, 1e-05
        %v443 = vadd.f32 %v437, 1e-05
        %v444 = vadd.f32 %v438, 1e-05
        %v445 = vrsqrt.pop %v439
        %v446 = vmul.f32 %v445, %v439
        %v447 = vmul.f32 %v446, %v445
        %v448 = vmul.f32 0.5, %v447
        %v449 = vsub.f32 1.5, %v448
        %v450 = vmul.f32 %v445, %v449
        %vm451 = vweird.f32 %v439
        %vm452 = vweird.f32 %v445
        %vm453 = vmor %vm451, %vm452
        %v454 = vsel %vm453, %v445, %v450
        %v455 = vrsqrt.pop %v440
        %v456 = vmul.f32 %v455, %v440
        %v457 = vmul.f32 %v456, %v455
        %v458 = vmul.f32 0.5, %v457
        %v459 = vsub.f32 1.5, %v458
        %v460 = vmul.f32 %v455, %v459
        %vm461 = vweird.f32 %v440
        %vm462 = vweird.f32 %v455
        %vm463 = vmor %vm461, %vm462
        %v464 = vsel %vm463, %v455, %v460
        %v465 = vrsqrt.pop %v441
        %v466 = vmul.f32 %v465, %v441
        %v467 = vmul.f32 %v466, %v465
        %v468 = vmul.f32 0.5, %v467
        %v469 = vsub.f32 1.5, %v468
        %v470 = vmul.f32 %v465, %v469
        %vm471 = vweird.f32 %v441
        %vm472 = vweird.f32 %v465
        %vm473 = vmor %vm471, %vm472
        %v474 = vsel %vm473, %v465, %v470
        %v475 = vrsqrt.pop %v442
        %v476 = vmul.f32 %v475, %v442
        %v477 = vmul.f32 %v476, %v475
        %v478 = vmul.f32 0.5, %v477
        %v479 = vsub.f32 1.5, %v478
        %v480 = vmul.f32 %v475, %v479
        %vm481 = vweird.f32 %v442
        %vm482 = vweird.f32 %v475
        %vm483 = vmor %vm481, %vm482
        %v484 = vsel %vm483, %v475, %v480
        %v485 = vrsqrt.pop %v443
        %v486 = vmul.f32 %v485, %v443
        %v487 = vmul.f32 %v486, %v485
        %v488 = vmul.f32 0.5, %v487
        %v489 = vsub.f32 1.5, %v488
        %v490 = vmul.f32 %v485, %v489
        %vm491 = vweird.f32 %v443
        %vm492 = vweird.f32 %v485
        %vm493 = vmor %vm491, %vm492
        %v494 = vsel %vm493, %v485, %v490
        %v495 = vrsqrt.pop %v444
        %v496 = vmul.f32 %v495, %v444
        %v497 = vmul.f32 %v496, %v495
        %v498 = vmul.f32 0.5, %v497
        %v499 = vsub.f32 1.5, %v498
        %v500 = vmul.f32 %v495, %v499
        %vm501 = vweird.f32 %v444
        %vm502 = vweird.f32 %v495
        %vm503 = vmor %vm501, %vm502
        %v504 = vsel %vm503, %v495, %v500
        %v505 = vmul.f32 %v409, %v454
        %v506 = vmul.f32 %v410, %v464
        %v507 = vmul.f32 %v411, %v474
        %v508 = vmul.f32 %v412, %v484
        %v509 = vmul.f32 %v413, %v494
        %v510 = vmul.f32 %v414, %v504
        %v511 = vld [vmem:[#allocation5] sm:$0x1]
        %v513 = vperm.slane %v511, 0
        %v515 = vmul.f32 %v505, %v513
        %v516 = vmul.f32 %v506, %v513
        %v517 = vmul.f32 %v507, %v513
        %v518 = vmul.f32 %v508, %v513
        %v519 = vmul.f32 %v509, %v513
        %v520 = vmul.f32 %v510, %v513
        %v521 = vld [vmem:[%s2] sm:$0x1]
        %v523 = vperm.slane %v521, 0
        %v525 = vadd.f32 %v515, %v523
        %v526 = vadd.f32 %v516, %v523
        %v527 = vadd.f32 %v517, %v523
        %v528 = vadd.f32 %v518, %v523
        %v529 = vadd.f32 %v519, %v523
        %v530 = vadd.f32 %v520, %v523
        %v531 = vpack.c.bf16 %v526, %v525
        %v532 = vpack.c.bf16 %v528, %v527
        %v533 = vpack.c.bf16 %v530, %v529
        %v534 = vld [vmem:[#allocation7] sm:$0xff]
        %v535 = vld [vmem:[#allocation7 + $0x8] sm:$0xff]
        %v536 = vld [vmem:[#allocation7 + $0x10] sm:$0xff]
        %v537 = vld [vmem:[#allocation7 + $0x18] sm:$0xff]
        %v538 = vld [vmem:[#allocation7 + $0x20] sm:$0xff]
        %v539 = vld [vmem:[#allocation7 + $0x28] sm:$0xff]
        %v540 = vld [vmem:[#allocation7 + $0x30] sm:$0xff]
        %v541 = vld [vmem:[#allocation7 + $0x38] sm:$0xff]
        %v542 = vld [vmem:[#allocation7 + $0x40] sm:$0xff]
        %v543 = vld [vmem:[#allocation7 + $0x48] sm:$0xff]
        %v544 = vld [vmem:[#allocation7 + $0x50] sm:$0xff]
        %v545 = vld [vmem:[#allocation7 + $0x58] sm:$0xff]
        %v546 = vld [vmem:[#allocation7 + $0x60] sm:$0xff]
        %v547 = vld [vmem:[#allocation7 + $0x68] sm:$0xff]
        %v548 = vld [vmem:[#allocation7 + $0x70] sm:$0xff]
        %v549 = vld [vmem:[#allocation7 + $0x78] sm:$0xff]
        %v550 = vld [vmem:[#allocation7 + $0x80] sm:$0xff]
        %v551 = vld [vmem:[#allocation7 + $0x88] sm:$0xff]
        %v552 = vld [vmem:[#allocation7 + $0x90] sm:$0xff]
        %v553 = vld [vmem:[#allocation7 + $0x98] sm:$0xff]
        %v554 = vld [vmem:[#allocation7 + $0xa0] sm:$0xff]
        %v555 = vld [vmem:[#allocation7 + $0xa8] sm:$0xff]
        %v556 = vld [vmem:[#allocation7 + $0xb0] sm:$0xff]
        %v557 = vld [vmem:[#allocation7 + $0xb8] sm:$0xff]
        %v558 = vld [vmem:[#allocation7 + $0xc0] sm:$0xff]
        %v559 = vld [vmem:[#allocation7 + $0xc8] sm:$0xff]
        %v560 = vld [vmem:[#allocation7 + $0xd0] sm:$0xff]
        %v561 = vld [vmem:[#allocation7 + $0xd8] sm:$0xff]
        %v562 = vld [vmem:[#allocation7 + $0xe0] sm:$0xff]
        %v563 = vld [vmem:[#allocation7 + $0xe8] sm:$0xff]
        %v564 = vld [vmem:[#allocation7 + $0xf0] sm:$0xff]
        %v565 = vld [vmem:[#allocation7 + $0xf8] sm:$0xff]
        %v566 = vld [vmem:[#allocation8] sm:$0xf]
        %v568 = vperm.slane %v566, 0
        %v569 = vperm.slane %v566, 1
        %v570 = vperm.slane %v566, 2
        %v571 = vperm.slane %v566, 3
        %v608 = vunpack.c.l.b16 %v534
        %v609 = vunpack.c.h.b16 %v534
        %v610 = vunpack.c.l.b16 %v535
        %v611 = vunpack.c.h.b16 %v535
        %v612 = vunpack.c.l.b16 %v536
        %v613 = vunpack.c.h.b16 %v536
        %v614 = vunpack.c.l.b16 %v537
        %v615 = vunpack.c.h.b16 %v537
        %v616 = vunpack.c.l.b16 %v538
        %v617 = vunpack.c.h.b16 %v538
        %v618 = vunpack.c.l.b16 %v539
        %v619 = vunpack.c.h.b16 %v539
        %v620 = vunpack.c.l.b16 %v540
        %v621 = vunpack.c.h.b16 %v540
        %v622 = vunpack.c.l.b16 %v541
        %v623 = vunpack.c.h.b16 %v541
        %v624 = vunpack.c.l.b16 %v542
        %v625 = vunpack.c.h.b16 %v542
        %v626 = vunpack.c.l.b16 %v543
        %v627 = vunpack.c.h.b16 %v543
        %v628 = vunpack.c.l.b16 %v544
        %v629 = vunpack.c.h.b16 %v544
        %v630 = vunpack.c.l.b16 %v545
        %v631 = vunpack.c.h.b16 %v545
        %v632 = vunpack.c.l.b16 %v546
        %v633 = vunpack.c.h.b16 %v546
        %v634 = vunpack.c.l.b16 %v547
        %v635 = vunpack.c.h.b16 %v547
        %v636 = vunpack.c.l.b16 %v548
        %v637 = vunpack.c.h.b16 %v548
        %v638 = vunpack.c.l.b16 %v549
        %v639 = vunpack.c.h.b16 %v549
        %v640 = vunpack.c.l.b16 %v550
        %v641 = vunpack.c.h.b16 %v550
        %v642 = vunpack.c.l.b16 %v551
        %v643 = vunpack.c.h.b16 %v551
        %v644 = vunpack.c.l.b16 %v552
        %v645 = vunpack.c.h.b16 %v552
        %v646 = vunpack.c.l.b16 %v553
        %v647 = vunpack.c.h.b16 %v553
        %v648 = vunpack.c.l.b16 %v554
        %v649 = vunpack.c.h.b16 %v554
        %v650 = vunpack.c.l.b16 %v555
        %v651 = vunpack.c.h.b16 %v555
        %v652 = vunpack.c.l.b16 %v556
        %v653 = vunpack.c.h.b16 %v556
        %v654 = vunpack.c.l.b16 %v557
        %v655 = vunpack.c.h.b16 %v557
        %v656 = vunpack.c.l.b16 %v558
        %v657 = vunpack.c.h.b16 %v558
        %v658 = vunpack.c.l.b16 %v559
        %v659 = vunpack.c.h.b16 %v559
        %v660 = vunpack.c.l.b16 %v560
        %v661 = vunpack.c.h.b16 %v560
        %v662 = vunpack.c.l.b16 %v561
        %v663 = vunpack.c.h.b16 %v561
        %v664 = vunpack.c.l.b16 %v562
        %v665 = vunpack.c.h.b16 %v562
        %v666 = vunpack.c.l.b16 %v563
        %v667 = vunpack.c.h.b16 %v563
        %v668 = vunpack.c.l.b16 %v564
        %v669 = vunpack.c.h.b16 %v564
        %v670 = vunpack.c.l.b16 %v565
        %v671 = vunpack.c.h.b16 %v565
        %v672 = vpack.c.b16 %v612, %v608
        %v673 = vpack.c.b16 %v613, %v609
        %v674 = vpack.c.b16 %v614, %v610
        %v675 = vpack.c.b16 %v615, %v611
        %v676 = vpack.c.b16 %v620, %v616
        %v677 = vpack.c.b16 %v621, %v617
        %v678 = vpack.c.b16 %v622, %v618
        %v679 = vpack.c.b16 %v623, %v619
        %v680 = vpack.c.b16 %v628, %v624
        %v681 = vpack.c.b16 %v629, %v625
        %v682 = vpack.c.b16 %v630, %v626
        %v683 = vpack.c.b16 %v631, %v627
        %v684 = vpack.c.b16 %v636, %v632
        %v685 = vpack.c.b16 %v637, %v633
        %v686 = vpack.c.b16 %v638, %v634
        %v687 = vpack.c.b16 %v639, %v635
        %v688 = vpack.c.b16 %v644, %v640
        %v689 = vpack.c.b16 %v645, %v641
        %v690 = vpack.c.b16 %v646, %v642
        %v691 = vpack.c.b16 %v647, %v643
        %v692 = vpack.c.b16 %v652, %v648
        %v693 = vpack.c.b16 %v653, %v649
        %v694 = vpack.c.b16 %v654, %v650
        %v695 = vpack.c.b16 %v655, %v651
        %v696 = vpack.c.b16 %v660, %v656
        %v697 = vpack.c.b16 %v661, %v657
        %v698 = vpack.c.b16 %v662, %v658
        %v699 = vpack.c.b16 %v663, %v659
        %v700 = vpack.c.b16 %v668, %v664
        %v701 = vpack.c.b16 %v669, %v665
        %v702 = vpack.c.b16 %v670, %v666
        %v703 = vpack.c.b16 %v671, %v667
        %736 = vmatpush.bf16.msra.mxu0 %v700
        %737 = vmatpush.bf16.msra.mxu0 %v696
        %738 = vmatpush.bf16.msra.mxu0 %v692
        %739 = vmatpush.bf16.msra.mxu0 %v688
        %740 = vmatpush.bf16.msra.mxu0 %v684
        %741 = vmatpush.bf16.msra.mxu0 %v680
        %742 = vmatpush.bf16.msra.mxu0 %v676
        %743 = vmatpush.bf16.msra.mxu0 %v672
        %744 = vmatmul.bf16.gmra.mxu0 %v531
        %v745 = vpop.f32.mrf.mxu0
        %v746 = vadd.f32 %v568, %v745
        %v747 = vpop.f32.mrf.mxu0
        %v748 = vadd.f32 %v568, %v747
        %749 = vmatmul.bf16.gmra.mxu0 %v532
        %v750 = vpop.f32.mrf.mxu0
        %v751 = vadd.f32 %v568, %v750
        %v752 = vpop.f32.mrf.mxu0
        %v753 = vadd.f32 %v568, %v752
        %754 = vmatmul.bf16.gmra.mxu0 %v533
        %v755 = vpop.f32.mrf.mxu0
        %v756 = vadd.f32 %v568, %v755
        %v757 = vpop.f32.mrf.mxu0
        %v758 = vadd.f32 %v568, %v757
        %759 = vdwg.mxu0
        %760 = vmatpush.bf16.msra.mxu0 %v701
        %761 = vmatpush.bf16.msra.mxu0 %v697
        %762 = vmatpush.bf16.msra.mxu0 %v693
        %763 = vmatpush.bf16.msra.mxu0 %v689
        %764 = vmatpush.bf16.msra.mxu0 %v685
        %765 = vmatpush.bf16.msra.mxu0 %v681
        %766 = vmatpush.bf16.msra.mxu0 %v677
        %767 = vmatpush.bf16.msra.mxu0 %v673
        %768 = vmatmul.bf16.gmra.mxu0 %v531
        %v769 = vpop.f32.mrf.mxu0
        %v770 = vadd.f32 %v569, %v769
        %v771 = vpop.f32.mrf.mxu0
        %v772 = vadd.f32 %v569, %v771
        %773 = vmatmul.bf16.gmra.mxu0 %v532
        %v774 = vpop.f32.mrf.mxu0
        %v775 = vadd.f32 %v569, %v774
        %v776 = vpop.f32.mrf.mxu0
        %v777 = vadd.f32 %v569, %v776
        %778 = vmatmul.bf16.gmra.mxu0 %v533
        %v779 = vpop.f32.mrf.mxu0
        %v780 = vadd.f32 %v569, %v779
        %v781 = vpop.f32.mrf.mxu0
        %v782 = vadd.f32 %v569, %v781
        %783 = vdwg.mxu0
        %784 = vmatpush.bf16.msra.mxu0 %v702
        %785 = vmatpush.bf16.msra.mxu0 %v698
        %786 = vmatpush.bf16.msra.mxu0 %v694
        %787 = vmatpush.bf16.msra.mxu0 %v690
        %788 = vmatpush.bf16.msra.mxu0 %v686
        %789 = vmatpush.bf16.msra.mxu0 %v682
        %790 = vmatpush.bf16.msra.mxu0 %v678
        %791 = vmatpush.bf16.msra.mxu0 %v674
        %792 = vmatmul.bf16.gmra.mxu0 %v531
        %v793 = vpop.f32.mrf.mxu0
        %v794 = vadd.f32 %v570, %v793
        %v795 = vpop.f32.mrf.mxu0
        %v796 = vadd.f32 %v570, %v795
        %797 = vmatmul.bf16.gmra.mxu0 %v532
        %v798 = vpop.f32.mrf.mxu0
        %v799 = vadd.f32 %v570, %v798
        %v800 = vpop.f32.mrf.mxu0
        %v801 = vadd.f32 %v570, %v800
        %802 = vmatmul.bf16.gmra.mxu0 %v533
        %v803 = vpop.f32.mrf.mxu0
        %v804 = vadd.f32 %v570, %v803
        %v805 = vpop.f32.mrf.mxu0
        %v806 = vadd.f32 %v570, %v805
        %807 = vdwg.mxu0
        %808 = vmatpush.bf16.msra.mxu0 %v703
        %809 = vmatpush.bf16.msra.mxu0 %v699
        %810 = vmatpush.bf16.msra.mxu0 %v695
        %811 = vmatpush.bf16.msra.mxu0 %v691
        %812 = vmatpush.bf16.msra.mxu0 %v687
        %813 = vmatpush.bf16.msra.mxu0 %v683
        %814 = vmatpush.bf16.msra.mxu0 %v679
        %815 = vmatpush.bf16.msra.mxu0 %v675
        %816 = vmatmul.bf16.gmra.mxu0 %v531
        %v817 = vpop.f32.mrf.mxu0
        %v818 = vadd.f32 %v571, %v817
        %v819 = vpop.f32.mrf.mxu0
        %v820 = vadd.f32 %v571, %v819
        %821 = vmatmul.bf16.gmra.mxu0 %v532
        %v822 = vpop.f32.mrf.mxu0
        %v823 = vadd.f32 %v571, %v822
        %v824 = vpop.f32.mrf.mxu0
        %v825 = vadd.f32 %v571, %v824
        %826 = vmatmul.bf16.gmra.mxu0 %v533
        %v827 = vpop.f32.mrf.mxu0
        %v828 = vadd.f32 %v571, %v827
        %v829 = vpop.f32.mrf.mxu0
        %v830 = vadd.f32 %v571, %v829
        %831 = vdwg.mxu0
        %v832 = vmul.f32 %v746, 0.5
        %v833 = vmul.f32 %v770, 0.5
        %v834 = vmul.f32 %v794, 0.5
        %v835 = vmul.f32 %v818, 0.5
        %v836 = vmul.f32 %v748, 0.5
        %v837 = vmul.f32 %v772, 0.5
        %v838 = vmul.f32 %v796, 0.5
        %v839 = vmul.f32 %v820, 0.5
        %v840 = vmul.f32 %v751, 0.5
        %v841 = vmul.f32 %v775, 0.5
        %v842 = vmul.f32 %v799, 0.5
        %v843 = vmul.f32 %v823, 0.5
        %v844 = vmul.f32 %v753, 0.5
        %v845 = vmul.f32 %v777, 0.5
        %v846 = vmul.f32 %v801, 0.5
        %v847 = vmul.f32 %v825, 0.5
        %v848 = vmul.f32 %v756, 0.5
        %v849 = vmul.f32 %v780, 0.5
        %v850 = vmul.f32 %v804, 0.5
        %v851 = vmul.f32 %v828, 0.5
        %v852 = vmul.f32 %v758, 0.5
        %v853 = vmul.f32 %v782, 0.5
        %v854 = vmul.f32 %v806, 0.5
        %v855 = vmul.f32 %v830, 0.5
        %v856 = vtanh.pop %v832
        %v857 = vtanh.pop %v833
        %v858 = vtanh.pop %v834
        %v859 = vtanh.pop %v835
        %v860 = vtanh.pop %v836
        %v861 = vtanh.pop %v837
        %v862 = vtanh.pop %v838
        %v863 = vtanh.pop %v839
        %v864 = vtanh.pop %v840
        %v865 = vtanh.pop %v841
        %v866 = vtanh.pop %v842
        %v867 = vtanh.pop %v843
        %v868 = vtanh.pop %v844
        %v869 = vtanh.pop %v845
        %v870 = vtanh.pop %v846
        %v871 = vtanh.pop %v847
        %v872 = vtanh.pop %v848
        %v873 = vtanh.pop %v849
        %v874 = vtanh.pop %v850
        %v875 = vtanh.pop %v851
        %v876 = vtanh.pop %v852
        %v877 = vtanh.pop %v853
        %v878 = vtanh.pop %v854
        %v879 = vtanh.pop %v855
        %v880 = vadd.f32 %v856, 1.0
        %v881 = vadd.f32 %v857, 1.0
        %v882 = vadd.f32 %v858, 1.0
        %v883 = vadd.f32 %v859, 1.0
        %v884 = vadd.f32 %v860, 1.0
        %v885 = vadd.f32 %v861, 1.0
        %v886 = vadd.f32 %v862, 1.0
        %v887 = vadd.f32 %v863, 1.0
        %v888 = vadd.f32 %v864, 1.0
        %v889 = vadd.f32 %v865, 1.0
        %v890 = vadd.f32 %v866, 1.0
        %v891 = vadd.f32 %v867, 1.0
        %v892 = vadd.f32 %v868, 1.0
        %v893 = vadd.f32 %v869, 1.0
        %v894 = vadd.f32 %v870, 1.0
        %v895 = vadd.f32 %v871, 1.0
        %v896 = vadd.f32 %v872, 1.0
        %v897 = vadd.f32 %v873, 1.0
        %v898 = vadd.f32 %v874, 1.0
        %v899 = vadd.f32 %v875, 1.0
        %v900 = vadd.f32 %v876, 1.0
        %v901 = vadd.f32 %v877, 1.0
        %v902 = vadd.f32 %v878, 1.0
        %v903 = vadd.f32 %v879, 1.0
        %v904 = vmul.f32 %v832, %v880
        %v905 = vmul.f32 %v833, %v881
        %v906 = vmul.f32 %v834, %v882
        %v907 = vmul.f32 %v835, %v883
        %v908 = vmul.f32 %v836, %v884
        %v909 = vmul.f32 %v837, %v885
        %v910 = vmul.f32 %v838, %v886
        %v911 = vmul.f32 %v839, %v887
        %v912 = vmul.f32 %v840, %v888
        %v913 = vmul.f32 %v841, %v889
        %v914 = vmul.f32 %v842, %v890
        %v915 = vmul.f32 %v843, %v891
        %v916 = vmul.f32 %v844, %v892
        %v917 = vmul.f32 %v845, %v893
        %v918 = vmul.f32 %v846, %v894
        %v919 = vmul.f32 %v847, %v895
        %v920 = vmul.f32 %v848, %v896
        %v921 = vmul.f32 %v849, %v897
        %v922 = vmul.f32 %v850, %v898
        %v923 = vmul.f32 %v851, %v899
        %v924 = vmul.f32 %v852, %v900
        %v925 = vmul.f32 %v853, %v901
        %v926 = vmul.f32 %v854, %v902
        %v927 = vmul.f32 %v855, %v903
        %v928 = vpack.c.bf16 %v908, %v904
        %v929 = vpack.c.bf16 %v909, %v905
        %v930 = vpack.c.bf16 %v910, %v906
        %v931 = vpack.c.bf16 %v911, %v907
        %v932 = vpack.c.bf16 %v916, %v912
        %v933 = vpack.c.bf16 %v917, %v913
        %v934 = vpack.c.bf16 %v918, %v914
        %v935 = vpack.c.bf16 %v919, %v915
        %v936 = vpack.c.bf16 %v924, %v920
        %v937 = vpack.c.bf16 %v925, %v921
        %v938 = vpack.c.bf16 %v926, %v922
        %v939 = vpack.c.bf16 %v927, %v923
        %v940 = vld [vmem:[#allocation10] sm:$0xf]
        %v941 = vld [vmem:[#allocation10 + $0x4] sm:$0xf]
        %v942 = vld [vmem:[#allocation10 + $0x8] sm:$0xf]
        %v943 = vld [vmem:[#allocation10 + $0xc] sm:$0xf]
        %v944 = vld [vmem:[#allocation10 + $0x10] sm:$0xf]
        %v945 = vld [vmem:[#allocation10 + $0x14] sm:$0xf]
        %v946 = vld [vmem:[#allocation10 + $0x18] sm:$0xf]
        %v947 = vld [vmem:[#allocation10 + $0x1c] sm:$0xf]
        %v948 = vld [vmem:[#allocation10 + $0x20] sm:$0xf]
        %v949 = vld [vmem:[#allocation10 + $0x24] sm:$0xf]
        %v950 = vld [vmem:[#allocation10 + $0x28] sm:$0xf]
        %v951 = vld [vmem:[#allocation10 + $0x2c] sm:$0xf]
        %v952 = vld [vmem:[#allocation10 + $0x30] sm:$0xf]
        %v953 = vld [vmem:[#allocation10 + $0x34] sm:$0xf]
        %v954 = vld [vmem:[#allocation10 + $0x38] sm:$0xf]
        %v955 = vld [vmem:[#allocation10 + $0x3c] sm:$0xf]
        %v956 = vld [vmem:[#allocation10 + $0x40] sm:$0xf]
        %v957 = vld [vmem:[#allocation10 + $0x44] sm:$0xf]
        %v958 = vld [vmem:[#allocation10 + $0x48] sm:$0xf]
        %v959 = vld [vmem:[#allocation10 + $0x4c] sm:$0xf]
        %v960 = vld [vmem:[#allocation10 + $0x50] sm:$0xf]
        %v961 = vld [vmem:[#allocation10 + $0x54] sm:$0xf]
        %v962 = vld [vmem:[#allocation10 + $0x58] sm:$0xf]
        %v963 = vld [vmem:[#allocation10 + $0x5c] sm:$0xf]
        %v964 = vld [vmem:[#allocation10 + $0x60] sm:$0xf]
        %v965 = vld [vmem:[#allocation10 + $0x64] sm:$0xf]
        %v966 = vld [vmem:[#allocation10 + $0x68] sm:$0xf]
        %v967 = vld [vmem:[#allocation10 + $0x6c] sm:$0xf]
        %v968 = vld [vmem:[#allocation10 + $0x70] sm:$0xf]
        %v969 = vld [vmem:[#allocation10 + $0x74] sm:$0xf]
        %v970 = vld [vmem:[#allocation10 + $0x78] sm:$0xf]
        %v971 = vld [vmem:[#allocation10 + $0x7c] sm:$0xf]
        %v972 = vld [vmem:[#allocation10 + $0x80] sm:$0xf]
        %v973 = vld [vmem:[#allocation10 + $0x84] sm:$0xf]
        %v974 = vld [vmem:[#allocation10 + $0x88] sm:$0xf]
        %v975 = vld [vmem:[#allocation10 + $0x8c] sm:$0xf]
        %v976 = vld [vmem:[#allocation10 + $0x90] sm:$0xf]
        %v977 = vld [vmem:[#allocation10 + $0x94] sm:$0xf]
        %v978 = vld [vmem:[#allocation10 + $0x98] sm:$0xf]
        %v979 = vld [vmem:[#allocation10 + $0x9c] sm:$0xf]
        %v980 = vld [vmem:[#allocation10 + $0xa0] sm:$0xf]
        %v981 = vld [vmem:[#allocation10 + $0xa4] sm:$0xf]
        %v982 = vld [vmem:[#allocation10 + $0xa8] sm:$0xf]
        %v983 = vld [vmem:[#allocation10 + $0xac] sm:$0xf]
        %v984 = vld [vmem:[#allocation10 + $0xb0] sm:$0xf]
        %v985 = vld [vmem:[#allocation10 + $0xb4] sm:$0xf]
        %v986 = vld [vmem:[#allocation10 + $0xb8] sm:$0xf]
        %v987 = vld [vmem:[#allocation10 + $0xbc] sm:$0xf]
        %v988 = vld [vmem:[#allocation10 + $0xc0] sm:$0xf]
        %v989 = vld [vmem:[#allocation10 + $0xc4] sm:$0xf]
        %v990 = vld [vmem:[#allocation10 + $0xc8] sm:$0xf]
        %v991 = vld [vmem:[#allocation10 + $0xcc] sm:$0xf]
        %v992 = vld [vmem:[#allocation10 + $0xd0] sm:$0xf]
        %v993 = vld [vmem:[#allocation10 + $0xd4] sm:$0xf]
        %v994 = vld [vmem:[#allocation10 + $0xd8] sm:$0xf]
        %v995 = vld [vmem:[#allocation10 + $0xdc] sm:$0xf]
        %v996 = vld [vmem:[#allocation10 + $0xe0] sm:$0xf]
        %v997 = vld [vmem:[#allocation10 + $0xe4] sm:$0xf]
        %v998 = vld [vmem:[#allocation10 + $0xe8] sm:$0xf]
        %v999 = vld [vmem:[#allocation10 + $0xec] sm:$0xf]
        %v1000 = vld [vmem:[#allocation10 + $0xf0] sm:$0xf]
        %v1001 = vld [vmem:[#allocation10 + $0xf4] sm:$0xf]
        %v1002 = vld [vmem:[#allocation10 + $0xf8] sm:$0xf]
        %v1003 = vld [vmem:[#allocation10 + $0xfc] sm:$0xf]
        %v1004 = vld [vmem:[%s6] sm:$0x1]
        %v1006 = vperm.slane %v1004, 0
        %v1072 = vunpack.c.l.b16 %v940
        %v1073 = vunpack.c.l.b16 %v941
        %v1074 = vunpack.c.l.b16 %v942
        %v1075 = vunpack.c.l.b16 %v943
        %v1076 = vunpack.c.l.b16 %v944
        %v1077 = vunpack.c.l.b16 %v945
        %v1078 = vunpack.c.l.b16 %v946
        %v1079 = vunpack.c.l.b16 %v947
        %v1080 = vunpack.c.l.b16 %v948
        %v1081 = vunpack.c.l.b16 %v949
        %v1082 = vunpack.c.l.b16 %v950
        %v1083 = vunpack.c.l.b16 %v951
        %v1084 = vunpack.c.l.b16 %v952
        %v1085 = vunpack.c.l.b16 %v953
        %v1086 = vunpack.c.l.b16 %v954
        %v1087 = vunpack.c.l.b16 %v955
        %v1088 = vunpack.c.l.b16 %v956
        %v1089 = vunpack.c.l.b16 %v957
        %v1090 = vunpack.c.l.b16 %v958
        %v1091 = vunpack.c.l.b16 %v959
        %v1092 = vunpack.c.l.b16 %v960
        %v1093 = vunpack.c.l.b16 %v961
        %v1094 = vunpack.c.l.b16 %v962
        %v1095 = vunpack.c.l.b16 %v963
        %v1096 = vunpack.c.l.b16 %v964
        %v1097 = vunpack.c.l.b16 %v965
        %v1098 = vunpack.c.l.b16 %v966
        %v1099 = vunpack.c.l.b16 %v967
        %v1100 = vunpack.c.l.b16 %v968
        %v1101 = vunpack.c.l.b16 %v969
        %v1102 = vunpack.c.l.b16 %v970
        %v1103 = vunpack.c.l.b16 %v971
        %v1104 = vunpack.c.l.b16 %v972
        %v1105 = vunpack.c.l.b16 %v973
        %v1106 = vunpack.c.l.b16 %v974
        %v1107 = vunpack.c.l.b16 %v975
        %v1108 = vunpack.c.l.b16 %v976
        %v1109 = vunpack.c.l.b16 %v977
        %v1110 = vunpack.c.l.b16 %v978
        %v1111 = vunpack.c.l.b16 %v979
        %v1112 = vunpack.c.l.b16 %v980
        %v1113 = vunpack.c.l.b16 %v981
        %v1114 = vunpack.c.l.b16 %v982
        %v1115 = vunpack.c.l.b16 %v983
        %v1116 = vunpack.c.l.b16 %v984
        %v1117 = vunpack.c.l.b16 %v985
        %v1118 = vunpack.c.l.b16 %v986
        %v1119 = vunpack.c.l.b16 %v987
        %v1120 = vunpack.c.l.b16 %v988
        %v1121 = vunpack.c.l.b16 %v989
        %v1122 = vunpack.c.l.b16 %v990
        %v1123 = vunpack.c.l.b16 %v991
        %v1124 = vunpack.c.l.b16 %v992
        %v1125 = vunpack.c.l.b16 %v993
        %v1126 = vunpack.c.l.b16 %v994
        %v1127 = vunpack.c.l.b16 %v995
        %v1128 = vunpack.c.l.b16 %v996
        %v1129 = vunpack.c.l.b16 %v997
        %v1130 = vunpack.c.l.b16 %v998
        %v1131 = vunpack.c.l.b16 %v999
        %v1132 = vunpack.c.l.b16 %v1000
        %v1133 = vunpack.c.l.b16 %v1001
        %v1134 = vunpack.c.l.b16 %v1002
        %v1135 = vunpack.c.l.b16 %v1003
        %v1136 = vpack.c.b16 %v1073, %v1072
        %v1137 = vpack.c.b16 %v1075, %v1074
        %v1138 = vpack.c.b16 %v1077, %v1076
        %v1139 = vpack.c.b16 %v1079, %v1078
        %v1140 = vpack.c.b16 %v1081, %v1080
        %v1141 = vpack.c.b16 %v1083, %v1082
        %v1142 = vpack.c.b16 %v1085, %v1084
        %v1143 = vpack.c.b16 %v1087, %v1086
        %v1144 = vpack.c.b16 %v1089, %v1088
        %v1145 = vpack.c.b16 %v1091, %v1090
        %v1146 = vpack.c.b16 %v1093, %v1092
        %v1147 = vpack.c.b16 %v1095, %v1094
        %v1148 = vpack.c.b16 %v1097, %v1096
        %v1149 = vpack.c.b16 %v1099, %v1098
        %v1150 = vpack.c.b16 %v1101, %v1100
        %v1151 = vpack.c.b16 %v1103, %v1102
        %v1152 = vpack.c.b16 %v1105, %v1104
        %v1153 = vpack.c.b16 %v1107, %v1106
        %v1154 = vpack.c.b16 %v1109, %v1108
        %v1155 = vpack.c.b16 %v1111, %v1110
        %v1156 = vpack.c.b16 %v1113, %v1112
        %v1157 = vpack.c.b16 %v1115, %v1114
        %v1158 = vpack.c.b16 %v1117, %v1116
        %v1159 = vpack.c.b16 %v1119, %v1118
        %v1160 = vpack.c.b16 %v1121, %v1120
        %v1161 = vpack.c.b16 %v1123, %v1122
        %v1162 = vpack.c.b16 %v1125, %v1124
        %v1163 = vpack.c.b16 %v1127, %v1126
        %v1164 = vpack.c.b16 %v1129, %v1128
        %v1165 = vpack.c.b16 %v1131, %v1130
        %v1166 = vpack.c.b16 %v1133, %v1132
        %v1167 = vpack.c.b16 %v1135, %v1134
        %1200 = vmatpush.bf16.msra.mxu0 %v1143
        %1201 = vmatpush.bf16.msra.mxu0 %v1142
        %1202 = vmatpush.bf16.msra.mxu0 %v1141
        %1203 = vmatpush.bf16.msra.mxu0 %v1140
        %1204 = vmatpush.bf16.msra.mxu0 %v1139
        %1205 = vmatpush.bf16.msra.mxu0 %v1138
        %1206 = vmatpush.bf16.msra.mxu0 %v1137
        %1207 = vmatpush.bf16.msra.mxu0 %v1136
        %1208 = vmatmul.bf16.gmra.mxu0 %v928
        %v1209 = vpop.f32.mrf.mxu0
        %v1210 = vadd.f32 %v1006, %v1209
        %v1211 = vpop.f32.mrf.mxu0
        %v1212 = vadd.f32 %v1006, %v1211
        %1213 = vmatmul.bf16.gmra.mxu0 %v932
        %v1214 = vpop.f32.mrf.mxu0
        %v1215 = vadd.f32 %v1006, %v1214
        %v1216 = vpop.f32.mrf.mxu0
        %v1217 = vadd.f32 %v1006, %v1216
        %1218 = vmatmul.bf16.gmra.mxu0 %v936
        %v1219 = vpop.f32.mrf.mxu0
        %v1220 = vadd.f32 %v1006, %v1219
        %v1221 = vpop.f32.mrf.mxu0
        %v1222 = vadd.f32 %v1006, %v1221
        %1223 = vdwg.mxu0
        %1224 = vmatpush.bf16.msra.mxu0 %v1151
        %1225 = vmatpush.bf16.msra.mxu0 %v1150
        %1226 = vmatpush.bf16.msra.mxu0 %v1149
        %1227 = vmatpush.bf16.msra.mxu0 %v1148
        %1228 = vmatpush.bf16.msra.mxu0 %v1147
        %1229 = vmatpush.bf16.msra.mxu0 %v1146
        %1230 = vmatpush.bf16.msra.mxu0 %v1145
        %1231 = vmatpush.bf16.msra.mxu0 %v1144
        %1232 = vmatmul.bf16.gmra.mxu0 %v929
        %v1233 = vpop.f32.mrf.mxu0
        %v1234 = vadd.f32 %v1210, %v1233
        %v1235 = vpop.f32.mrf.mxu0
        %v1236 = vadd.f32 %v1212, %v1235
        %1237 = vmatmul.bf16.gmra.mxu0 %v933
        %v1238 = vpop.f32.mrf.mxu0
        %v1239 = vadd.f32 %v1215, %v1238
        %v1240 = vpop.f32.mrf.mxu0
        %v1241 = vadd.f32 %v1217, %v1240
        %1242 = vmatmul.bf16.gmra.mxu0 %v937
        %v1243 = vpop.f32.mrf.mxu0
        %v1244 = vadd.f32 %v1220, %v1243
        %v1245 = vpop.f32.mrf.mxu0
        %v1246 = vadd.f32 %v1222, %v1245
        %1247 = vdwg.mxu0
        %1248 = vmatpush.bf16.msra.mxu0 %v1159
        %1249 = vmatpush.bf16.msra.mxu0 %v1158
        %1250 = vmatpush.bf16.msra.mxu0 %v1157
        %1251 = vmatpush.bf16.msra.mxu0 %v1156
        %1252 = vmatpush.bf16.msra.mxu0 %v1155
        %1253 = vmatpush.bf16.msra.mxu0 %v1154
        %1254 = vmatpush.bf16.msra.mxu0 %v1153
        %1255 = vmatpush.bf16.msra.mxu0 %v1152
        %1256 = vmatmul.bf16.gmra.mxu0 %v930
        %v1257 = vpop.f32.mrf.mxu0
        %v1258 = vadd.f32 %v1234, %v1257
        %v1259 = vpop.f32.mrf.mxu0
        %v1260 = vadd.f32 %v1236, %v1259
        %1261 = vmatmul.bf16.gmra.mxu0 %v934
        %v1262 = vpop.f32.mrf.mxu0
        %v1263 = vadd.f32 %v1239, %v1262
        %v1264 = vpop.f32.mrf.mxu0
        %v1265 = vadd.f32 %v1241, %v1264
        %1266 = vmatmul.bf16.gmra.mxu0 %v938
        %v1267 = vpop.f32.mrf.mxu0
        %v1268 = vadd.f32 %v1244, %v1267
        %v1269 = vpop.f32.mrf.mxu0
        %v1270 = vadd.f32 %v1246, %v1269
        %1271 = vdwg.mxu0
        %1272 = vmatpush.bf16.msra.mxu0 %v1167
        %1273 = vmatpush.bf16.msra.mxu0 %v1166
        %1274 = vmatpush.bf16.msra.mxu0 %v1165
        %1275 = vmatpush.bf16.msra.mxu0 %v1164
        %1276 = vmatpush.bf16.msra.mxu0 %v1163
        %1277 = vmatpush.bf16.msra.mxu0 %v1162
        %1278 = vmatpush.bf16.msra.mxu0 %v1161
        %1279 = vmatpush.bf16.msra.mxu0 %v1160
        %1280 = vmatmul.bf16.gmra.mxu0 %v931
        %v1281 = vpop.f32.mrf.mxu0
        %v1282 = vadd.f32 %v1258, %v1281
        %v1283 = vpop.f32.mrf.mxu0
        %v1284 = vadd.f32 %v1260, %v1283
        %1285 = vmatmul.bf16.gmra.mxu0 %v935
        %v1286 = vpop.f32.mrf.mxu0
        %v1287 = vadd.f32 %v1263, %v1286
        %v1288 = vpop.f32.mrf.mxu0
        %v1289 = vadd.f32 %v1265, %v1288
        %1290 = vmatmul.bf16.gmra.mxu0 %v939
        %v1291 = vpop.f32.mrf.mxu0
        %v1292 = vadd.f32 %v1268, %v1291
        %v1293 = vpop.f32.mrf.mxu0
        %v1294 = vadd.f32 %v1270, %v1293
        %1295 = vdwg.mxu0
        %1296 = vst [vmem:[%s367] sm:$0xff] %v1282
        %1297 = vst [vmem:[%s367 + $0x8] sm:$0xff] %v1284
        %1298 = vst [vmem:[%s367 + $0x10] sm:$0xff] %v1287
        %1299 = vst [vmem:[%s367 + $0x18] sm:$0xff] %v1289
        %1300 = vst [vmem:[%s367 + $0x20] sm:$0xff] %v1292
        %1301 = vst [vmem:[%s367 + $0x28] sm:$0xff] %v1294
        %s1302 = sand.u32 %s186, 1
        %s1303 = scalar_lea.sflag [#allocation4], %s1302
        %s1304 = sand.u32 %s186, 1
        %s1305 = smul.addr %s1304, 48
        %s1306 = scalar_lea.vmem [#allocation11], %s1305
        // Predicated region
        $region69: #{tpu_custom_call.1} parent=47 // pred_check
          %p1307 = pneg %p196
        $region70: #{tpu_custom_call.1} parent=47 // pred_check_branch
          %1309 = sbr.rel (%p1307) target = $region72
        $region71: #{tpu_custom_call.1} parent=47 // pred_region
          %s1310 = smul.u32 6, %s26
          %s1311 = ssub.s32 11, %s1310
          %p1312 = scmp.lt.s32.totalorder %s1311, 6
          %s1313 = scalar_select %p1312, %s1311, 6
          %s1314 = smul.u32 8, %s1313
          %s1315 = ssub.s32 48, %s1314
          %s1316 = sshll.u32 %s1315, 4
          %1317 = vsyncadd %s1303, %s1316
          %p1318 = scmp.ne.s32.totalorder 0, %s1314
          %s1319 = smul.addr %s1310, 8
          %s1320 = scalar_lea.hbm %s7, %s1319
          %s1321 = smul.u32 8, %s1313
          %s1322 = sshll.u32 %s1306, 4
          %s1323 = int_to_ptr.vmem [resolvable:$true] %s1322
          %s1324 = sshll.u32 %s1320, 4
          %s1325 = int_to_ptr.hbm [resolvable:$true] %s1324
          %s1326 = sshll.u32 %s1321, 4
          %1330 = dma.vmem_to_hbm [thread:$0]  (%p1318), %s1323, %s1326, %s1325, %s1303, 128, 128, 8
        $region72: #{tpu_custom_call.1} parent=47 // pred_fallthru
          _
      $region48: #{tpu_custom_call.1} parent=5 // pred_fallthru
        _
      %p1331 = scmp.le.s32.totalorder 2, %s21
      // Predicated region
      $region73: #{tpu_custom_call.1} parent=5 // pred_check
        %p1332 = pneg %p1331
      $region74: #{tpu_custom_call.1} parent=5 // pred_check_branch
        %1334 = sbr.rel (%p1332) target = $region76
      $region75: #{tpu_custom_call.1} parent=5 // pred_region
        %s1335 = ssub.s32 %s21, 2
        // Predicated region
        $region77: #{tpu_custom_call.1} parent=75 // pred_check
          %p1336 = pneg %p202
        $region78: #{tpu_custom_call.1} parent=75 // pred_check_branch
          %1338 = sbr.rel (%p1336) target = $region80
        $region79: #{tpu_custom_call.1} parent=75 // pred_region
          %s1339 = sand.u32 %s187, 1
          %s1340 = scalar_lea.sflag [#allocation4], %s1339
          %s1341 = sand.u32 %s187, 1
          %s1342 = smul.addr %s1341, 48
          %s1343 = scalar_lea.vmem [#allocation11], %s1342
          %1345 = dma.done %s1340, 768
        $region80: #{tpu_custom_call.1} parent=75 // pred_fallthru
          _
      $region76: #{tpu_custom_call.1} parent=5 // pred_fallthru
        _
    $region6: #{tpu_custom_call.1} parent=1 // loop_footer
      %s25 = sadd.s32 1, %s21
    $region7: #{tpu_custom_call.1} parent=1 // loop_footer_branch
      %20 = sbr.rel target = $region3
    $region8: #{tpu_custom_call.1} parent=1 // loop_exit
      _
    %1346 = vsyncpa [#allocation3], 1
    %s1347 = scalar_lea.sflag [#allocation3], 1
    %1348 = vsyncpa %s1347, 1
    %1349 = vsyncpa [#allocation6], 1
    %1350 = vsyncpa [#allocation9], 1
    %1351 = vsyncpa [#allocation4], 1
    %s1352 = scalar_lea.sflag [#allocation4], 1
    %1353 = vsyncpa %s1352, 1

</llo_original>
